<compile_context>
chip_gen: v5e
topology: v5e:2x2
jax: 0.10.0
libtpu: 0.0.40
codegen_flags: <defaults>
</compile_context>

<pallas_src>
import math

import jax
import jax.numpy as jnp
from jax.experimental import pallas as pl
from jax.experimental.pallas import tpu as pltpu


# ----------------------------------------------------------------------------
# Fused Pallas kernel: L stacked LSTM layers over T steps + final FC.
# ----------------------------------------------------------------------------
def make_fused_lstm_fc_kernel(T, B, D, H, L, O):
    def kernel(*refs):
        # refs: x (T*B, D),
        #       [w_ih_t, w_hh_t, bias] * L,
        #       fc_w_t (H, O), fc_b (1, O),
        #       out (B, O),
        #       gx_sc VMEM (T, B, 4H), seq_sc VMEM (T, B, H)
        x_ref = refs[0]
        idx = 1
        layer_refs = []
        for _ in range(L):
            layer_refs.append((refs[idx], refs[idx + 1], refs[idx + 2]))
            idx += 3
        w_fc_ref, b_fc_ref = refs[idx], refs[idx + 1]
        out_ref = refs[idx + 2]
        gx_sc = refs[idx + 3]
        seq_sc = refs[idx + 4]

        # Lane mask picking the g-gate lanes (PyTorch gate order i|f|g|o).
        # Built once, reused by every cell invocation.
        lane = jax.lax.broadcasted_iota(jnp.int32, (B, 4 * H), 1)
        g_lanes = (lane >= 2 * H) & (lane < 3 * H)

        def cell(gates, c_prev):
            # Full-width EUP activations over the whole (B, 4H) vreg, then one
            # select; only the cheap combine uses per-gate lane slices.
            sig = jax.nn.sigmoid(gates)
            tnh = jnp.tanh(gates)
            act = jnp.where(g_lanes, tnh, sig)
            i_g = act[:, 0 * H:1 * H]
            f_g = act[:, 1 * H:2 * H]
            g_g = act[:, 2 * H:3 * H]
            o_g = act[:, 3 * H:4 * H]
            c_new = f_g * c_prev + i_g * g_g
            h_new = o_g * jnp.tanh(c_new)
            return h_new, c_new

        zeros = jnp.zeros((B, H), jnp.float32)
        h_last = zeros

        # Layer-major: time recurrence nested inside a static layer loop.
        for l in range(L):
            w_ih_ref, w_hh_ref, b_ref = layer_refs[l]
            is_last_layer = (l == L - 1)

            # --- Hoisted input projection for THIS layer: one well-shaped
            # (T*B, in) @ (in, 4H) matmul, bias folded in once.  Off the
            # recurrent critical path.
            if l == 0:
                x_in = x_ref[...]                        # (T*B, D)
            else:
                x_in = seq_sc[...].reshape(T * B, H)     # previous layer's seq
            gx = (
                jnp.dot(x_in, w_ih_ref[...], preferred_element_type=jnp.float32)
                + b_ref[...]
            )
            gx_sc[...] = gx.reshape(T, B, 4 * H)

            # --- Hoist the recurrent weight load out of the time loop.
            w_hh = w_hh_ref[...]

            def step(t, carry, w_hh=w_hh, is_last_layer=is_last_layer):
                h_prev, c_prev = carry
                # gx_sc[t]: aligned leading-dim load, no sublane relayout.
                gates = gx_sc[t] + jnp.dot(
                    h_prev, w_hh, preferred_element_type=jnp.float32)
                h_new, c_new = cell(gates, c_prev)
                if not is_last_layer:
                    seq_sc[t] = h_new   # feeds next layer's hoisted projection
                return (h_new, c_new)

            # Short fixed trip-count -> full unroll for LLO scheduler
            # visibility (switch to partial unroll if T grows).
            h_fin, _ = jax.lax.fori_loop(0, T, step, (zeros, zeros),
                                         unroll=True)
            h_last = h_fin

        # Final classifier on the last hidden state of the top layer.
        out_ref[...] = (
            jnp.dot(h_last, w_fc_ref[...], preferred_element_type=jnp.float32)
            + b_fc_ref[...]
        )

    return kernel


# ----------------------------------------------------------------------------
# Wrapper (mirrors LSTMClassifier.forward)
# ----------------------------------------------------------------------------
def lstm_classifier_forward(x, params):
    """LSTM (zero init state, batch_first) -> fc(last timestep)."""
    if x.ndim == 2:                        # x.unsqueeze(1) equivalent
        x = x[:, None, :]
    B, T, D = x.shape
    L = len(params["lstm"])
    H = params["lstm"][0]["w_hh_t"].shape[0]
    O = params["fc_w_t"].shape[1]

    # Time-major flatten: row t*B + b holds x[b, t, :].
    x_tm = jnp.transpose(x, (1, 0, 2)).reshape(T * B, D)

    inputs = [x_tm]
    for layer in params["lstm"]:
        inputs.extend([layer["w_ih_t"], layer["w_hh_t"], layer["bias"]])
    inputs.extend([params["fc_w_t"], params["fc_b"]])

    kernel = make_fused_lstm_fc_kernel(T, B, D, H, L, O)
    return pl.pallas_call(
        kernel,
        out_shape=jax.ShapeDtypeStruct((B, O), jnp.float32),
        # Whole arrays fit easily in VMEM at these sizes; no grid needed —
        # the recurrence runs as in-kernel loops over the VMEM scratches.
        scratch_shapes=[
            pltpu.VMEM((T, B, 4 * H), jnp.float32),   # per-layer hoisted gates
            pltpu.VMEM((T, B, H), jnp.float32),       # per-layer hidden sequence
        ],
    )(*inputs)


# ----------------------------------------------------------------------------
# Deterministic parameter init (PyTorch-style uniform(-1/sqrt(H), 1/sqrt(H)))
# ----------------------------------------------------------------------------
def init_params(key, input_dim, hidden_dim, layer_dim, output_dim):
    k = 1.0 / math.sqrt(hidden_dim)
    params = {"lstm": []}
    for l in range(layer_dim):
        in_dim = input_dim if l == 0 else hidden_dim
        key, k1, k2, k3, k4 = jax.random.split(key, 5)
        w_ih = jax.random.uniform(k1, (4 * hidden_dim, in_dim), jnp.float32, -k, k)
        w_hh = jax.random.uniform(k2, (4 * hidden_dim, hidden_dim), jnp.float32, -k, k)
        b_ih = jax.random.uniform(k3, (4 * hidden_dim,), jnp.float32, -k, k)
        b_hh = jax.random.uniform(k4, (4 * hidden_dim,), jnp.float32, -k, k)
        params["lstm"].append(
            {
                "w_ih_t": w_ih.T,                # (in, 4H)
                "w_hh_t": w_hh.T,                # (H, 4H)
                "bias": (b_ih + b_hh)[None, :],  # (1, 4H) combined bias
            }
        )
    key, k5, k6 = jax.random.split(key, 3)
    kf = 1.0 / math.sqrt(hidden_dim)
    fc_w = jax.random.uniform(k5, (output_dim, hidden_dim), jnp.float32, -kf, kf)
    fc_b = jax.random.uniform(k6, (output_dim,), jnp.float32, -kf, kf)
    params["fc_w_t"] = fc_w.T                    # (H, O)
    params["fc_b"] = fc_b[None, :]               # (1, O)
    return params


# ----------------------------------------------------------------------------
# Pure-JAX reference (for a correctness assert)
# ----------------------------------------------------------------------------
def reference_forward(x, params):
    if x.ndim == 2:
        x = x[:, None, :]
    B, T, _ = x.shape
    seq = x
    for layer in params["lstm"]:
        H = layer["w_hh_t"].shape[0]
        h = jnp.zeros((B, H), jnp.float32)
        c = jnp.zeros((B, H), jnp.float32)
        outs = []
        for t in range(T):
            gates = seq[:, t, :] @ layer["w_ih_t"] + h @ layer["w_hh_t"] + layer["bias"]
            i_g = jax.nn.sigmoid(gates[:, 0 * H:1 * H])
            f_g = jax.nn.sigmoid(gates[:, 1 * H:2 * H])
            g_g = jnp.tanh(gates[:, 2 * H:3 * H])
            o_g = jax.nn.sigmoid(gates[:, 3 * H:4 * H])
            c = f_g * c + i_g * g_g
            h = o_g * jnp.tanh(c)
            outs.append(h)
        seq = jnp.stack(outs, axis=1)
    return seq[:, -1, :] @ params["fc_w_t"] + params["fc_b"]


# ----------------------------------------------------------------------------
if __name__ == "__main__":
    # Small shapes consistent with the module's forward.
    batch, seq_len = 2, 8
    input_dim, hidden_dim, layer_dim, output_dim = 16, 32, 2, 4

    key = jax.random.PRNGKey(0)
    key, pkey, xkey = jax.random.split(key, 3)
    params = init_params(pkey, input_dim, hidden_dim, layer_dim, output_dim)
    x = jax.random.normal(xkey, (batch, seq_len, input_dim), jnp.float32)

    out = lstm_classifier_forward(x, params)
    out = jax.block_until_ready(out)

    ref = reference_forward(x, params)
    assert out.shape == (batch, output_dim)
    assert jnp.allclose(out, ref, atol=2e-4, rtol=2e-4), "mismatch vs reference"

    print("KERNEL_OK")
</pallas_src>

<mosaic_0001>
module attributes {stable_mosaic.version = 11 : i64} {
  func.func @kernel(%arg0: memref<16x16xf32, #tpu.memory_space<vmem>>, %arg1: memref<16x128xf32, #tpu.memory_space<vmem>>, %arg2: memref<32x128xf32, #tpu.memory_space<vmem>>, %arg3: memref<1x128xf32, #tpu.memory_space<vmem>>, %arg4: memref<32x128xf32, #tpu.memory_space<vmem>>, %arg5: memref<32x128xf32, #tpu.memory_space<vmem>>, %arg6: memref<1x128xf32, #tpu.memory_space<vmem>>, %arg7: memref<32x4xf32, #tpu.memory_space<vmem>>, %arg8: memref<1x4xf32, #tpu.memory_space<vmem>>, %arg9: memref<2x4xf32, #tpu.memory_space<vmem>>, %arg10: memref<8x2x128xf32, #tpu.memory_space<vmem>>, %arg11: memref<8x2x32xf32, #tpu.memory_space<vmem>>) attributes {dimension_semantics = [], scalar_prefetch = 0 : i64, scratch_operands = 2 : i64, tpu.core_type = #tpu.core_type<tc>} {
    %0 = tpu.iota {dimensions = array<i32: 1>} : vector<2x128xi32>
    %c64_i32 = arith.constant 64 : i32
    %1 = vector.broadcast %c64_i32 : i32 to vector<2x128xi32>
    %2 = arith.cmpi sge, %0, %1 : vector<2x128xi32>
    %c96_i32 = arith.constant 96 : i32
    %3 = vector.broadcast %c96_i32 : i32 to vector<2x128xi32>
    %4 = arith.cmpi slt, %0, %3 : vector<2x128xi32>
    %5 = arith.andi %2, %4 : vector<2x128xi1>
    %cst = arith.constant 0.000000e+00 : f32
    %6 = vector.broadcast %cst : f32 to vector<2x32xf32>
    %c0 = arith.constant 0 : index
    %c0_0 = arith.constant 0 : index
    %7 = vector.load %arg0[%c0, %c0_0] : memref<16x16xf32, #tpu.memory_space<vmem>>, vector<16x16xf32>
    %c0_1 = arith.constant 0 : index
    %c0_2 = arith.constant 0 : index
    %8 = vector.load %arg1[%c0_1, %c0_2] : memref<16x128xf32, #tpu.memory_space<vmem>>, vector<16x128xf32>
    %cst_3 = arith.constant dense<0.000000e+00> : vector<16x128xf32>
    %9 = tpu.matmul %7, %8, %cst_3 {dimension_numbers = #tpu.dot_dimension_numbers<[1], [0], [0], [1], [0, 0, 1, 1], [], []>} : vector<16x16xf32>, vector<16x128xf32>, vector<16x128xf32> -> vector<16x128xf32>
    %c0_4 = arith.constant 0 : index
    %c0_5 = arith.constant 0 : index
    %10 = vector.load %arg3[%c0_4, %c0_5] : memref<1x128xf32, #tpu.memory_space<vmem>>, vector<1x128xf32>
    %11 = vector.broadcast %10 : vector<1x128xf32> to vector<16x128xf32>
    %12 = arith.addf %9, %11 : vector<16x128xf32>
    %13 = vector.shape_cast %12 : vector<16x128xf32> to vector<8x2x128xf32>
    %c0_6 = arith.constant 0 : index
    %c0_7 = arith.constant 0 : index
    %c0_8 = arith.constant 0 : index
    %14 = vector.load %arg10[%c0_6, %c0_7, %c0_8] : memref<8x2x128xf32, #tpu.memory_space<vmem>>, vector<8x2x128xf32>
    tpu.vector_store %arg10[%c0_6, %c0_7, %c0_8], %13 {strides = array<i32>} : memref<8x2x128xf32, #tpu.memory_space<vmem>>, vector<8x2x128xf32>,
    %c0_9 = arith.constant 0 : index
    %c0_10 = arith.constant 0 : index
    %15 = vector.load %arg2[%c0_9, %c0_10] : memref<32x128xf32, #tpu.memory_space<vmem>>, vector<32x128xf32>
    %c0_i32 = arith.constant 0 : i32
    %16 = arith.index_cast %c0_i32 : i32 to index
    %c0_11 = arith.constant 0 : index
    %c0_12 = arith.constant 0 : index
    %17 = vector.load %arg10[%16, %c0_11, %c0_12] : memref<8x2x128xf32, #tpu.memory_space<vmem>>, vector<1x2x128xf32>
    %18 = vector.shape_cast %17 : vector<1x2x128xf32> to vector<2x128xf32>
    %cst_13 = arith.constant dense<0.000000e+00> : vector<2x128xf32>
    %19 = tpu.matmul %6, %15, %cst_13 {dimension_numbers = #tpu.dot_dimension_numbers<[1], [0], [0], [1], [0, 0, 1, 1], [], []>} : vector<2x32xf32>, vector<32x128xf32>, vector<2x128xf32> -> vector<2x128xf32>
    %20 = arith.addf %18, %19 : vector<2x128xf32>
    %21 = arith.negf %20 : vector<2x128xf32>
    %22 = math.exp %21 : vector<2x128xf32>
    %cst_14 = arith.constant 1.000000e+00 : f32
    %23 = vector.broadcast %cst_14 : f32 to vector<2x128xf32>
    %24 = arith.addf %23, %22 : vector<2x128xf32>
    %25 = arith.divf %23, %24 : vector<2x128xf32>
    %26 = math.tanh %20 : vector<2x128xf32>
    %27 = arith.select %5, %26, %25 : vector<2x128xi1>, vector<2x128xf32>
    %28 = vector.extract_strided_slice %27 {offsets = [0, 0], sizes = [2, 32], strides = [1, 1]} : vector<2x128xf32> to vector<2x32xf32>
    %29 = vector.extract_strided_slice %27 {offsets = [0, 32], sizes = [2, 32], strides = [1, 1]} : vector<2x128xf32> to vector<2x32xf32>
    %30 = vector.extract_strided_slice %27 {offsets = [0, 64], sizes = [2, 32], strides = [1, 1]} : vector<2x128xf32> to vector<2x32xf32>
    %31 = vector.extract_strided_slice %27 {offsets = [0, 96], sizes = [2, 32], strides = [1, 1]} : vector<2x128xf32> to vector<2x32xf32>
    %32 = arith.mulf %29, %6 : vector<2x32xf32>
    %33 = arith.mulf %28, %30 : vector<2x32xf32>
    %34 = arith.addf %32, %33 : vector<2x32xf32>
    %35 = math.tanh %34 : vector<2x32xf32>
    %36 = arith.mulf %31, %35 : vector<2x32xf32>
    %37 = arith.index_cast %c0_i32 : i32 to index
    %c0_15 = arith.constant 0 : index
    %c0_16 = arith.constant 0 : index
    %38 = vector.load %arg11[%37, %c0_15, %c0_16] : memref<8x2x32xf32, #tpu.memory_space<vmem>>, vector<1x2x32xf32>
    %39 = vector.shape_cast %38 : vector<1x2x32xf32> to vector<2x32xf32>
    %40 = vector.shape_cast %36 : vector<2x32xf32> to vector<1x2x32xf32>
    tpu.vector_store %arg11[%37, %c0_15, %c0_16], %40 {strides = array<i32>} : memref<8x2x32xf32, #tpu.memory_space<vmem>>, vector<1x2x32xf32>,
    %c1_i32 = arith.constant 1 : i32
    %41 = arith.index_cast %c1_i32 : i32 to index
    %c0_17 = arith.constant 0 : index
    %c0_18 = arith.constant 0 : index
    %42 = vector.load %arg10[%41, %c0_17, %c0_18] : memref<8x2x128xf32, #tpu.memory_space<vmem>>, vector<1x2x128xf32>
    %43 = vector.shape_cast %42 : vector<1x2x128xf32> to vector<2x128xf32>
    %cst_19 = arith.constant dense<0.000000e+00> : vector<2x128xf32>
    %44 = tpu.matmul %36, %15, %cst_19 {dimension_numbers = #tpu.dot_dimension_numbers<[1], [0], [0], [1], [0, 0, 1, 1], [], []>} : vector<2x32xf32>, vector<32x128xf32>, vector<2x128xf32> -> vector<2x128xf32>
    %45 = arith.addf %43, %44 : vector<2x128xf32>
    %46 = arith.negf %45 : vector<2x128xf32>
    %47 = math.exp %46 : vector<2x128xf32>
    %cst_20 = arith.constant 1.000000e+00 : f32
    %48 = vector.broadcast %cst_20 : f32 to vector<2x128xf32>
    %49 = arith.addf %48, %47 : vector<2x128xf32>
    %50 = arith.divf %48, %49 : vector<2x128xf32>
    %51 = math.tanh %45 : vector<2x128xf32>
    %52 = arith.select %5, %51, %50 : vector<2x128xi1>, vector<2x128xf32>
    %53 = vector.extract_strided_slice %52 {offsets = [0, 0], sizes = [2, 32], strides = [1, 1]} : vector<2x128xf32> to vector<2x32xf32>
    %54 = vector.extract_strided_slice %52 {offsets = [0, 32], sizes = [2, 32], strides = [1, 1]} : vector<2x128xf32> to vector<2x32xf32>
    %55 = vector.extract_strided_slice %52 {offsets = [0, 64], sizes = [2, 32], strides = [1, 1]} : vector<2x128xf32> to vector<2x32xf32>
    %56 = vector.extract_strided_slice %52 {offsets = [0, 96], sizes = [2, 32], strides = [1, 1]} : vector<2x128xf32> to vector<2x32xf32>
    %57 = arith.mulf %54, %34 : vector<2x32xf32>
    %58 = arith.mulf %53, %55 : vector<2x32xf32>
    %59 = arith.addf %57, %58 : vector<2x32xf32>
    %60 = math.tanh %59 : vector<2x32xf32>
    %61 = arith.mulf %56, %60 : vector<2x32xf32>
    %62 = arith.index_cast %c1_i32 : i32 to index
    %c0_21 = arith.constant 0 : index
    %c0_22 = arith.constant 0 : index
    %63 = vector.load %arg11[%62, %c0_21, %c0_22] : memref<8x2x32xf32, #tpu.memory_space<vmem>>, vector<1x2x32xf32>
    %64 = vector.shape_cast %63 : vector<1x2x32xf32> to vector<2x32xf32>
    %65 = vector.shape_cast %61 : vector<2x32xf32> to vector<1x2x32xf32>
    tpu.vector_store %arg11[%62, %c0_21, %c0_22], %65 {strides = array<i32>} : memref<8x2x32xf32, #tpu.memory_space<vmem>>, vector<1x2x32xf32>,
    %c2_i32 = arith.constant 2 : i32
    %66 = arith.index_cast %c2_i32 : i32 to index
    %c0_23 = arith.constant 0 : index
    %c0_24 = arith.constant 0 : index
    %67 = vector.load %arg10[%66, %c0_23, %c0_24] : memref<8x2x128xf32, #tpu.memory_space<vmem>>, vector<1x2x128xf32>
    %68 = vector.shape_cast %67 : vector<1x2x128xf32> to vector<2x128xf32>
    %cst_25 = arith.constant dense<0.000000e+00> : vector<2x128xf32>
    %69 = tpu.matmul %61, %15, %cst_25 {dimension_numbers = #tpu.dot_dimension_numbers<[1], [0], [0], [1], [0, 0, 1, 1], [], []>} : vector<2x32xf32>, vector<32x128xf32>, vector<2x128xf32> -> vector<2x128xf32>
    %70 = arith.addf %68, %69 : vector<2x128xf32>
    %71 = arith.negf %70 : vector<2x128xf32>
    %72 = math.exp %71 : vector<2x128xf32>
    %cst_26 = arith.constant 1.000000e+00 : f32
    %73 = vector.broadcast %cst_26 : f32 to vector<2x128xf32>
    %74 = arith.addf %73, %72 : vector<2x128xf32>
    %75 = arith.divf %73, %74 : vector<2x128xf32>
    %76 = math.tanh %70 : vector<2x128xf32>
    %77 = arith.select %5, %76, %75 : vector<2x128xi1>, vector<2x128xf32>
    %78 = vector.extract_strided_slice %77 {offsets = [0, 0], sizes = [2, 32], strides = [1, 1]} : vector<2x128xf32> to vector<2x32xf32>
    %79 = vector.extract_strided_slice %77 {offsets = [0, 32], sizes = [2, 32], strides = [1, 1]} : vector<2x128xf32> to vector<2x32xf32>
    %80 = vector.extract_strided_slice %77 {offsets = [0, 64], sizes = [2, 32], strides = [1, 1]} : vector<2x128xf32> to vector<2x32xf32>
    %81 = vector.extract_strided_slice %77 {offsets = [0, 96], sizes = [2, 32], strides = [1, 1]} : vector<2x128xf32> to vector<2x32xf32>
    %82 = arith.mulf %79, %59 : vector<2x32xf32>
    %83 = arith.mulf %78, %80 : vector<2x32xf32>
    %84 = arith.addf %82, %83 : vector<2x32xf32>
    %85 = math.tanh %84 : vector<2x32xf32>
    %86 = arith.mulf %81, %85 : vector<2x32xf32>
    %87 = arith.index_cast %c2_i32 : i32 to index
    %c0_27 = arith.constant 0 : index
    %c0_28 = arith.constant 0 : index
    %88 = vector.load %arg11[%87, %c0_27, %c0_28] : memref<8x2x32xf32, #tpu.memory_space<vmem>>, vector<1x2x32xf32>
    %89 = vector.shape_cast %88 : vector<1x2x32xf32> to vector<2x32xf32>
    %90 = vector.shape_cast %86 : vector<2x32xf32> to vector<1x2x32xf32>
    tpu.vector_store %arg11[%87, %c0_27, %c0_28], %90 {strides = array<i32>} : memref<8x2x32xf32, #tpu.memory_space<vmem>>, vector<1x2x32xf32>,
    %c3_i32 = arith.constant 3 : i32
    %91 = arith.index_cast %c3_i32 : i32 to index
    %c0_29 = arith.constant 0 : index
    %c0_30 = arith.constant 0 : index
    %92 = vector.load %arg10[%91, %c0_29, %c0_30] : memref<8x2x128xf32, #tpu.memory_space<vmem>>, vector<1x2x128xf32>
    %93 = vector.shape_cast %92 : vector<1x2x128xf32> to vector<2x128xf32>
    %cst_31 = arith.constant dense<0.000000e+00> : vector<2x128xf32>
    %94 = tpu.matmul %86, %15, %cst_31 {dimension_numbers = #tpu.dot_dimension_numbers<[1], [0], [0], [1], [0, 0, 1, 1], [], []>} : vector<2x32xf32>, vector<32x128xf32>, vector<2x128xf32> -> vector<2x128xf32>
    %95 = arith.addf %93, %94 : vector<2x128xf32>
    %96 = arith.negf %95 : vector<2x128xf32>
    %97 = math.exp %96 : vector<2x128xf32>
    %cst_32 = arith.constant 1.000000e+00 : f32
    %98 = vector.broadcast %cst_32 : f32 to vector<2x128xf32>
    %99 = arith.addf %98, %97 : vector<2x128xf32>
    %100 = arith.divf %98, %99 : vector<2x128xf32>
    %101 = math.tanh %95 : vector<2x128xf32>
    %102 = arith.select %5, %101, %100 : vector<2x128xi1>, vector<2x128xf32>
    %103 = vector.extract_strided_slice %102 {offsets = [0, 0], sizes = [2, 32], strides = [1, 1]} : vector<2x128xf32> to vector<2x32xf32>
    %104 = vector.extract_strided_slice %102 {offsets = [0, 32], sizes = [2, 32], strides = [1, 1]} : vector<2x128xf32> to vector<2x32xf32>
    %105 = vector.extract_strided_slice %102 {offsets = [0, 64], sizes = [2, 32], strides = [1, 1]} : vector<2x128xf32> to vector<2x32xf32>
    %106 = vector.extract_strided_slice %102 {offsets = [0, 96], sizes = [2, 32], strides = [1, 1]} : vector<2x128xf32> to vector<2x32xf32>
    %107 = arith.mulf %104, %84 : vector<2x32xf32>
    %108 = arith.mulf %103, %105 : vector<2x32xf32>
    %109 = arith.addf %107, %108 : vector<2x32xf32>
    %110 = math.tanh %109 : vector<2x32xf32>
    %111 = arith.mulf %106, %110 : vector<2x32xf32>
    %112 = arith.index_cast %c3_i32 : i32 to index
    %c0_33 = arith.constant 0 : index
    %c0_34 = arith.constant 0 : index
    %113 = vector.load %arg11[%112, %c0_33, %c0_34] : memref<8x2x32xf32, #tpu.memory_space<vmem>>, vector<1x2x32xf32>
    %114 = vector.shape_cast %113 : vector<1x2x32xf32> to vector<2x32xf32>
    %115 = vector.shape_cast %111 : vector<2x32xf32> to vector<1x2x32xf32>
    tpu.vector_store %arg11[%112, %c0_33, %c0_34], %115 {strides = array<i32>} : memref<8x2x32xf32, #tpu.memory_space<vmem>>, vector<1x2x32xf32>,
    %c4_i32 = arith.constant 4 : i32
    %116 = arith.index_cast %c4_i32 : i32 to index
    %c0_35 = arith.constant 0 : index
    %c0_36 = arith.constant 0 : index
    %117 = vector.load %arg10[%116, %c0_35, %c0_36] : memref<8x2x128xf32, #tpu.memory_space<vmem>>, vector<1x2x128xf32>
    %118 = vector.shape_cast %117 : vector<1x2x128xf32> to vector<2x128xf32>
    %cst_37 = arith.constant dense<0.000000e+00> : vector<2x128xf32>
    %119 = tpu.matmul %111, %15, %cst_37 {dimension_numbers = #tpu.dot_dimension_numbers<[1], [0], [0], [1], [0, 0, 1, 1], [], []>} : vector<2x32xf32>, vector<32x128xf32>, vector<2x128xf32> -> vector<2x128xf32>
    %120 = arith.addf %118, %119 : vector<2x128xf32>
    %121 = arith.negf %120 : vector<2x128xf32>
    %122 = math.exp %121 : vector<2x128xf32>
    %cst_38 = arith.constant 1.000000e+00 : f32
    %123 = vector.broadcast %cst_38 : f32 to vector<2x128xf32>
    %124 = arith.addf %123, %122 : vector<2x128xf32>
    %125 = arith.divf %123, %124 : vector<2x128xf32>
    %126 = math.tanh %120 : vector<2x128xf32>
    %127 = arith.select %5, %126, %125 : vector<2x128xi1>, vector<2x128xf32>
    %128 = vector.extract_strided_slice %127 {offsets = [0, 0], sizes = [2, 32], strides = [1, 1]} : vector<2x128xf32> to vector<2x32xf32>
    %129 = vector.extract_strided_slice %127 {offsets = [0, 32], sizes = [2, 32], strides = [1, 1]} : vector<2x128xf32> to vector<2x32xf32>
    %130 = vector.extract_strided_slice %127 {offsets = [0, 64], sizes = [2, 32], strides = [1, 1]} : vector<2x128xf32> to vector<2x32xf32>
    %131 = vector.extract_strided_slice %127 {offsets = [0, 96], sizes = [2, 32], strides = [1, 1]} : vector<2x128xf32> to vector<2x32xf32>
    %132 = arith.mulf %129, %109 : vector<2x32xf32>
    %133 = arith.mulf %128, %130 : vector<2x32xf32>
    %134 = arith.addf %132, %133 : vector<2x32xf32>
    %135 = math.tanh %134 : vector<2x32xf32>
    %136 = arith.mulf %131, %135 : vector<2x32xf32>
    %137 = arith.index_cast %c4_i32 : i32 to index
    %c0_39 = arith.constant 0 : index
    %c0_40 = arith.constant 0 : index
    %138 = vector.load %arg11[%137, %c0_39, %c0_40] : memref<8x2x32xf32, #tpu.memory_space<vmem>>, vector<1x2x32xf32>
    %139 = vector.shape_cast %138 : vector<1x2x32xf32> to vector<2x32xf32>
    %140 = vector.shape_cast %136 : vector<2x32xf32> to vector<1x2x32xf32>
    tpu.vector_store %arg11[%137, %c0_39, %c0_40], %140 {strides = array<i32>} : memref<8x2x32xf32, #tpu.memory_space<vmem>>, vector<1x2x32xf32>,
    %c5_i32 = arith.constant 5 : i32
    %141 = arith.index_cast %c5_i32 : i32 to index
    %c0_41 = arith.constant 0 : index
    %c0_42 = arith.constant 0 : index
    %142 = vector.load %arg10[%141, %c0_41, %c0_42] : memref<8x2x128xf32, #tpu.memory_space<vmem>>, vector<1x2x128xf32>
    %143 = vector.shape_cast %142 : vector<1x2x128xf32> to vector<2x128xf32>
    %cst_43 = arith.constant dense<0.000000e+00> : vector<2x128xf32>
    %144 = tpu.matmul %136, %15, %cst_43 {dimension_numbers = #tpu.dot_dimension_numbers<[1], [0], [0], [1], [0, 0, 1, 1], [], []>} : vector<2x32xf32>, vector<32x128xf32>, vector<2x128xf32> -> vector<2x128xf32>
    %145 = arith.addf %143, %144 : vector<2x128xf32>
    %146 = arith.negf %145 : vector<2x128xf32>
    %147 = math.exp %146 : vector<2x128xf32>
    %cst_44 = arith.constant 1.000000e+00 : f32
    %148 = vector.broadcast %cst_44 : f32 to vector<2x128xf32>
    %149 = arith.addf %148, %147 : vector<2x128xf32>
    %150 = arith.divf %148, %149 : vector<2x128xf32>
    %151 = math.tanh %145 : vector<2x128xf32>
    %152 = arith.select %5, %151, %150 : vector<2x128xi1>, vector<2x128xf32>
    %153 = vector.extract_strided_slice %152 {offsets = [0, 0], sizes = [2, 32], strides = [1, 1]} : vector<2x128xf32> to vector<2x32xf32>
    %154 = vector.extract_strided_slice %152 {offsets = [0, 32], sizes = [2, 32], strides = [1, 1]} : vector<2x128xf32> to vector<2x32xf32>
    %155 = vector.extract_strided_slice %152 {offsets = [0, 64], sizes = [2, 32], strides = [1, 1]} : vector<2x128xf32> to vector<2x32xf32>
    %156 = vector.extract_strided_slice %152 {offsets = [0, 96], sizes = [2, 32], strides = [1, 1]} : vector<2x128xf32> to vector<2x32xf32>
    %157 = arith.mulf %154, %134 : vector<2x32xf32>
    %158 = arith.mulf %153, %155 : vector<2x32xf32>
    %159 = arith.addf %157, %158 : vector<2x32xf32>
    %160 = math.tanh %159 : vector<2x32xf32>
    %161 = arith.mulf %156, %160 : vector<2x32xf32>
    %162 = arith.index_cast %c5_i32 : i32 to index
    %c0_45 = arith.constant 0 : index
    %c0_46 = arith.constant 0 : index
    %163 = vector.load %arg11[%162, %c0_45, %c0_46] : memref<8x2x32xf32, #tpu.memory_space<vmem>>, vector<1x2x32xf32>
    %164 = vector.shape_cast %163 : vector<1x2x32xf32> to vector<2x32xf32>
    %165 = vector.shape_cast %161 : vector<2x32xf32> to vector<1x2x32xf32>
    tpu.vector_store %arg11[%162, %c0_45, %c0_46], %165 {strides = array<i32>} : memref<8x2x32xf32, #tpu.memory_space<vmem>>, vector<1x2x32xf32>,
    %c6_i32 = arith.constant 6 : i32
    %166 = arith.index_cast %c6_i32 : i32 to index
    %c0_47 = arith.constant 0 : index
    %c0_48 = arith.constant 0 : index
    %167 = vector.load %arg10[%166, %c0_47, %c0_48] : memref<8x2x128xf32, #tpu.memory_space<vmem>>, vector<1x2x128xf32>
    %168 = vector.shape_cast %167 : vector<1x2x128xf32> to vector<2x128xf32>
    %cst_49 = arith.constant dense<0.000000e+00> : vector<2x128xf32>
    %169 = tpu.matmul %161, %15, %cst_49 {dimension_numbers = #tpu.dot_dimension_numbers<[1], [0], [0], [1], [0, 0, 1, 1], [], []>} : vector<2x32xf32>, vector<32x128xf32>, vector<2x128xf32> -> vector<2x128xf32>
    %170 = arith.addf %168, %169 : vector<2x128xf32>
    %171 = arith.negf %170 : vector<2x128xf32>
    %172 = math.exp %171 : vector<2x128xf32>
    %cst_50 = arith.constant 1.000000e+00 : f32
    %173 = vector.broadcast %cst_50 : f32 to vector<2x128xf32>
    %174 = arith.addf %173, %172 : vector<2x128xf32>
    %175 = arith.divf %173, %174 : vector<2x128xf32>
    %176 = math.tanh %170 : vector<2x128xf32>
    %177 = arith.select %5, %176, %175 : vector<2x128xi1>, vector<2x128xf32>
    %178 = vector.extract_strided_slice %177 {offsets = [0, 0], sizes = [2, 32], strides = [1, 1]} : vector<2x128xf32> to vector<2x32xf32>
    %179 = vector.extract_strided_slice %177 {offsets = [0, 32], sizes = [2, 32], strides = [1, 1]} : vector<2x128xf32> to vector<2x32xf32>
    %180 = vector.extract_strided_slice %177 {offsets = [0, 64], sizes = [2, 32], strides = [1, 1]} : vector<2x128xf32> to vector<2x32xf32>
    %181 = vector.extract_strided_slice %177 {offsets = [0, 96], sizes = [2, 32], strides = [1, 1]} : vector<2x128xf32> to vector<2x32xf32>
    %182 = arith.mulf %179, %159 : vector<2x32xf32>
    %183 = arith.mulf %178, %180 : vector<2x32xf32>
    %184 = arith.addf %182, %183 : vector<2x32xf32>
    %185 = math.tanh %184 : vector<2x32xf32>
    %186 = arith.mulf %181, %185 : vector<2x32xf32>
    %187 = arith.index_cast %c6_i32 : i32 to index
    %c0_51 = arith.constant 0 : index
    %c0_52 = arith.constant 0 : index
    %188 = vector.load %arg11[%187, %c0_51, %c0_52] : memref<8x2x32xf32, #tpu.memory_space<vmem>>, vector<1x2x32xf32>
    %189 = vector.shape_cast %188 : vector<1x2x32xf32> to vector<2x32xf32>
    %190 = vector.shape_cast %186 : vector<2x32xf32> to vector<1x2x32xf32>
    tpu.vector_store %arg11[%187, %c0_51, %c0_52], %190 {strides = array<i32>} : memref<8x2x32xf32, #tpu.memory_space<vmem>>, vector<1x2x32xf32>,
    %c7_i32 = arith.constant 7 : i32
    %191 = arith.index_cast %c7_i32 : i32 to index
    %c0_53 = arith.constant 0 : index
    %c0_54 = arith.constant 0 : index
    %192 = vector.load %arg10[%191, %c0_53, %c0_54] : memref<8x2x128xf32, #tpu.memory_space<vmem>>, vector<1x2x128xf32>
    %193 = vector.shape_cast %192 : vector<1x2x128xf32> to vector<2x128xf32>
    %cst_55 = arith.constant dense<0.000000e+00> : vector<2x128xf32>
    %194 = tpu.matmul %186, %15, %cst_55 {dimension_numbers = #tpu.dot_dimension_numbers<[1], [0], [0], [1], [0, 0, 1, 1], [], []>} : vector<2x32xf32>, vector<32x128xf32>, vector<2x128xf32> -> vector<2x128xf32>
    %195 = arith.addf %193, %194 : vector<2x128xf32>
    %196 = arith.negf %195 : vector<2x128xf32>
    %197 = math.exp %196 : vector<2x128xf32>
    %cst_56 = arith.constant 1.000000e+00 : f32
    %198 = vector.broadcast %cst_56 : f32 to vector<2x128xf32>
    %199 = arith.addf %198, %197 : vector<2x128xf32>
    %200 = arith.divf %198, %199 : vector<2x128xf32>
    %201 = math.tanh %195 : vector<2x128xf32>
    %202 = arith.select %5, %201, %200 : vector<2x128xi1>, vector<2x128xf32>
    %203 = vector.extract_strided_slice %202 {offsets = [0, 0], sizes = [2, 32], strides = [1, 1]} : vector<2x128xf32> to vector<2x32xf32>
    %204 = vector.extract_strided_slice %202 {offsets = [0, 32], sizes = [2, 32], strides = [1, 1]} : vector<2x128xf32> to vector<2x32xf32>
    %205 = vector.extract_strided_slice %202 {offsets = [0, 64], sizes = [2, 32], strides = [1, 1]} : vector<2x128xf32> to vector<2x32xf32>
    %206 = vector.extract_strided_slice %202 {offsets = [0, 96], sizes = [2, 32], strides = [1, 1]} : vector<2x128xf32> to vector<2x32xf32>
    %207 = arith.mulf %204, %184 : vector<2x32xf32>
    %208 = arith.mulf %203, %205 : vector<2x32xf32>
    %209 = arith.addf %207, %208 : vector<2x32xf32>
    %210 = math.tanh %209 : vector<2x32xf32>
    %211 = arith.mulf %206, %210 : vector<2x32xf32>
    %212 = arith.index_cast %c7_i32 : i32 to index
    %c0_57 = arith.constant 0 : index
    %c0_58 = arith.constant 0 : index
    %213 = vector.load %arg11[%212, %c0_57, %c0_58] : memref<8x2x32xf32, #tpu.memory_space<vmem>>, vector<1x2x32xf32>
    %214 = vector.shape_cast %213 : vector<1x2x32xf32> to vector<2x32xf32>
    %215 = vector.shape_cast %211 : vector<2x32xf32> to vector<1x2x32xf32>
    tpu.vector_store %arg11[%212, %c0_57, %c0_58], %215 {strides = array<i32>} : memref<8x2x32xf32, #tpu.memory_space<vmem>>, vector<1x2x32xf32>,
    %c8_i32 = arith.constant 8 : i32
    %c0_59 = arith.constant 0 : index
    %c0_60 = arith.constant 0 : index
    %c0_61 = arith.constant 0 : index
    %216 = vector.load %arg11[%c0_59, %c0_60, %c0_61] : memref<8x2x32xf32, #tpu.memory_space<vmem>>, vector<8x2x32xf32>
    %217 = vector.shape_cast %216 : vector<8x2x32xf32> to vector<16x32xf32>
    %c0_62 = arith.constant 0 : index
    %c0_63 = arith.constant 0 : index
    %218 = vector.load %arg4[%c0_62, %c0_63] : memref<32x128xf32, #tpu.memory_space<vmem>>, vector<32x128xf32>
    %cst_64 = arith.constant dense<0.000000e+00> : vector<16x128xf32>
    %219 = tpu.matmul %217, %218, %cst_64 {dimension_numbers = #tpu.dot_dimension_numbers<[1], [0], [0], [1], [0, 0, 1, 1], [], []>} : vector<16x32xf32>, vector<32x128xf32>, vector<16x128xf32> -> vector<16x128xf32>
    %c0_65 = arith.constant 0 : index
    %c0_66 = arith.constant 0 : index
    %220 = vector.load %arg6[%c0_65, %c0_66] : memref<1x128xf32, #tpu.memory_space<vmem>>, vector<1x128xf32>
    %221 = vector.broadcast %220 : vector<1x128xf32> to vector<16x128xf32>
    %222 = arith.addf %219, %221 : vector<16x128xf32>
    %223 = vector.shape_cast %222 : vector<16x128xf32> to vector<8x2x128xf32>
    %c0_67 = arith.constant 0 : index
    %c0_68 = arith.constant 0 : index
    %c0_69 = arith.constant 0 : index
    %224 = vector.load %arg10[%c0_67, %c0_68, %c0_69] : memref<8x2x128xf32, #tpu.memory_space<vmem>>, vector<8x2x128xf32>
    tpu.vector_store %arg10[%c0_67, %c0_68, %c0_69], %223 {strides = array<i32>} : memref<8x2x128xf32, #tpu.memory_space<vmem>>, vector<8x2x128xf32>,
    %c0_70 = arith.constant 0 : index
    %c0_71 = arith.constant 0 : index
    %225 = vector.load %arg5[%c0_70, %c0_71] : memref<32x128xf32, #tpu.memory_space<vmem>>, vector<32x128xf32>
    %c0_i32_72 = arith.constant 0 : i32
    %226 = arith.index_cast %c0_i32_72 : i32 to index
    %c0_73 = arith.constant 0 : index
    %c0_74 = arith.constant 0 : index
    %227 = vector.load %arg10[%226, %c0_73, %c0_74] : memref<8x2x128xf32, #tpu.memory_space<vmem>>, vector<1x2x128xf32>
    %228 = vector.shape_cast %227 : vector<1x2x128xf32> to vector<2x128xf32>
    %cst_75 = arith.constant dense<0.000000e+00> : vector<2x128xf32>
    %229 = tpu.matmul %6, %225, %cst_75 {dimension_numbers = #tpu.dot_dimension_numbers<[1], [0], [0], [1], [0, 0, 1, 1], [], []>} : vector<2x32xf32>, vector<32x128xf32>, vector<2x128xf32> -> vector<2x128xf32>
    %230 = arith.addf %228, %229 : vector<2x128xf32>
    %231 = arith.negf %230 : vector<2x128xf32>
    %232 = math.exp %231 : vector<2x128xf32>
    %cst_76 = arith.constant 1.000000e+00 : f32
    %233 = vector.broadcast %cst_76 : f32 to vector<2x128xf32>
    %234 = arith.addf %233, %232 : vector<2x128xf32>
    %235 = arith.divf %233, %234 : vector<2x128xf32>
    %236 = math.tanh %230 : vector<2x128xf32>
    %237 = arith.select %5, %236, %235 : vector<2x128xi1>, vector<2x128xf32>
    %238 = vector.extract_strided_slice %237 {offsets = [0, 0], sizes = [2, 32], strides = [1, 1]} : vector<2x128xf32> to vector<2x32xf32>
    %239 = vector.extract_strided_slice %237 {offsets = [0, 32], sizes = [2, 32], strides = [1, 1]} : vector<2x128xf32> to vector<2x32xf32>
    %240 = vector.extract_strided_slice %237 {offsets = [0, 64], sizes = [2, 32], strides = [1, 1]} : vector<2x128xf32> to vector<2x32xf32>
    %241 = vector.extract_strided_slice %237 {offsets = [0, 96], sizes = [2, 32], strides = [1, 1]} : vector<2x128xf32> to vector<2x32xf32>
    %242 = arith.mulf %239, %6 : vector<2x32xf32>
    %243 = arith.mulf %238, %240 : vector<2x32xf32>
    %244 = arith.addf %242, %243 : vector<2x32xf32>
    %245 = math.tanh %244 : vector<2x32xf32>
    %246 = arith.mulf %241, %245 : vector<2x32xf32>
    %c1_i32_77 = arith.constant 1 : i32
    %247 = arith.index_cast %c1_i32_77 : i32 to index
    %c0_78 = arith.constant 0 : index
    %c0_79 = arith.constant 0 : index
    %248 = vector.load %arg10[%247, %c0_78, %c0_79] : memref<8x2x128xf32, #tpu.memory_space<vmem>>, vector<1x2x128xf32>
    %249 = vector.shape_cast %248 : vector<1x2x128xf32> to vector<2x128xf32>
    %cst_80 = arith.constant dense<0.000000e+00> : vector<2x128xf32>
    %250 = tpu.matmul %246, %225, %cst_80 {dimension_numbers = #tpu.dot_dimension_numbers<[1], [0], [0], [1], [0, 0, 1, 1], [], []>} : vector<2x32xf32>, vector<32x128xf32>, vector<2x128xf32> -> vector<2x128xf32>
    %251 = arith.addf %249, %250 : vector<2x128xf32>
    %252 = arith.negf %251 : vector<2x128xf32>
    %253 = math.exp %252 : vector<2x128xf32>
    %cst_81 = arith.constant 1.000000e+00 : f32
    %254 = vector.broadcast %cst_81 : f32 to vector<2x128xf32>
    %255 = arith.addf %254, %253 : vector<2x128xf32>
    %256 = arith.divf %254, %255 : vector<2x128xf32>
    %257 = math.tanh %251 : vector<2x128xf32>
    %258 = arith.select %5, %257, %256 : vector<2x128xi1>, vector<2x128xf32>
    %259 = vector.extract_strided_slice %258 {offsets = [0, 0], sizes = [2, 32], strides = [1, 1]} : vector<2x128xf32> to vector<2x32xf32>
    %260 = vector.extract_strided_slice %258 {offsets = [0, 32], sizes = [2, 32], strides = [1, 1]} : vector<2x128xf32> to vector<2x32xf32>
    %261 = vector.extract_strided_slice %258 {offsets = [0, 64], sizes = [2, 32], strides = [1, 1]} : vector<2x128xf32> to vector<2x32xf32>
    %262 = vector.extract_strided_slice %258 {offsets = [0, 96], sizes = [2, 32], strides = [1, 1]} : vector<2x128xf32> to vector<2x32xf32>
    %263 = arith.mulf %260, %244 : vector<2x32xf32>
    %264 = arith.mulf %259, %261 : vector<2x32xf32>
    %265 = arith.addf %263, %264 : vector<2x32xf32>
    %266 = math.tanh %265 : vector<2x32xf32>
    %267 = arith.mulf %262, %266 : vector<2x32xf32>
    %c2_i32_82 = arith.constant 2 : i32
    %268 = arith.index_cast %c2_i32_82 : i32 to index
    %c0_83 = arith.constant 0 : index
    %c0_84 = arith.constant 0 : index
    %269 = vector.load %arg10[%268, %c0_83, %c0_84] : memref<8x2x128xf32, #tpu.memory_space<vmem>>, vector<1x2x128xf32>
    %270 = vector.shape_cast %269 : vector<1x2x128xf32> to vector<2x128xf32>
    %cst_85 = arith.constant dense<0.000000e+00> : vector<2x128xf32>
    %271 = tpu.matmul %267, %225, %cst_85 {dimension_numbers = #tpu.dot_dimension_numbers<[1], [0], [0], [1], [0, 0, 1, 1], [], []>} : vector<2x32xf32>, vector<32x128xf32>, vector<2x128xf32> -> vector<2x128xf32>
    %272 = arith.addf %270, %271 : vector<2x128xf32>
    %273 = arith.negf %272 : vector<2x128xf32>
    %274 = math.exp %273 : vector<2x128xf32>
    %cst_86 = arith.constant 1.000000e+00 : f32
    %275 = vector.broadcast %cst_86 : f32 to vector<2x128xf32>
    %276 = arith.addf %275, %274 : vector<2x128xf32>
    %277 = arith.divf %275, %276 : vector<2x128xf32>
    %278 = math.tanh %272 : vector<2x128xf32>
    %279 = arith.select %5, %278, %277 : vector<2x128xi1>, vector<2x128xf32>
    %280 = vector.extract_strided_slice %279 {offsets = [0, 0], sizes = [2, 32], strides = [1, 1]} : vector<2x128xf32> to vector<2x32xf32>
    %281 = vector.extract_strided_slice %279 {offsets = [0, 32], sizes = [2, 32], strides = [1, 1]} : vector<2x128xf32> to vector<2x32xf32>
    %282 = vector.extract_strided_slice %279 {offsets = [0, 64], sizes = [2, 32], strides = [1, 1]} : vector<2x128xf32> to vector<2x32xf32>
    %283 = vector.extract_strided_slice %279 {offsets = [0, 96], sizes = [2, 32], strides = [1, 1]} : vector<2x128xf32> to vector<2x32xf32>
    %284 = arith.mulf %281, %265 : vector<2x32xf32>
    %285 = arith.mulf %280, %282 : vector<2x32xf32>
    %286 = arith.addf %284, %285 : vector<2x32xf32>
    %287 = math.tanh %286 : vector<2x32xf32>
    %288 = arith.mulf %283, %287 : vector<2x32xf32>
    %c3_i32_87 = arith.constant 3 : i32
    %289 = arith.index_cast %c3_i32_87 : i32 to index
    %c0_88 = arith.constant 0 : index
    %c0_89 = arith.constant 0 : index
    %290 = vector.load %arg10[%289, %c0_88, %c0_89] : memref<8x2x128xf32, #tpu.memory_space<vmem>>, vector<1x2x128xf32>
    %291 = vector.shape_cast %290 : vector<1x2x128xf32> to vector<2x128xf32>
    %cst_90 = arith.constant dense<0.000000e+00> : vector<2x128xf32>
    %292 = tpu.matmul %288, %225, %cst_90 {dimension_numbers = #tpu.dot_dimension_numbers<[1], [0], [0], [1], [0, 0, 1, 1], [], []>} : vector<2x32xf32>, vector<32x128xf32>, vector<2x128xf32> -> vector<2x128xf32>
    %293 = arith.addf %291, %292 : vector<2x128xf32>
    %294 = arith.negf %293 : vector<2x128xf32>
    %295 = math.exp %294 : vector<2x128xf32>
    %cst_91 = arith.constant 1.000000e+00 : f32
    %296 = vector.broadcast %cst_91 : f32 to vector<2x128xf32>
    %297 = arith.addf %296, %295 : vector<2x128xf32>
    %298 = arith.divf %296, %297 : vector<2x128xf32>
    %299 = math.tanh %293 : vector<2x128xf32>
    %300 = arith.select %5, %299, %298 : vector<2x128xi1>, vector<2x128xf32>
    %301 = vector.extract_strided_slice %300 {offsets = [0, 0], sizes = [2, 32], strides = [1, 1]} : vector<2x128xf32> to vector<2x32xf32>
    %302 = vector.extract_strided_slice %300 {offsets = [0, 32], sizes = [2, 32], strides = [1, 1]} : vector<2x128xf32> to vector<2x32xf32>
    %303 = vector.extract_strided_slice %300 {offsets = [0, 64], sizes = [2, 32], strides = [1, 1]} : vector<2x128xf32> to vector<2x32xf32>
    %304 = vector.extract_strided_slice %300 {offsets = [0, 96], sizes = [2, 32], strides = [1, 1]} : vector<2x128xf32> to vector<2x32xf32>
    %305 = arith.mulf %302, %286 : vector<2x32xf32>
    %306 = arith.mulf %301, %303 : vector<2x32xf32>
    %307 = arith.addf %305, %306 : vector<2x32xf32>
    %308 = math.tanh %307 : vector<2x32xf32>
    %309 = arith.mulf %304, %308 : vector<2x32xf32>
    %c4_i32_92 = arith.constant 4 : i32
    %310 = arith.index_cast %c4_i32_92 : i32 to index
    %c0_93 = arith.constant 0 : index
    %c0_94 = arith.constant 0 : index
    %311 = vector.load %arg10[%310, %c0_93, %c0_94] : memref<8x2x128xf32, #tpu.memory_space<vmem>>, vector<1x2x128xf32>
    %312 = vector.shape_cast %311 : vector<1x2x128xf32> to vector<2x128xf32>
    %cst_95 = arith.constant dense<0.000000e+00> : vector<2x128xf32>
    %313 = tpu.matmul %309, %225, %cst_95 {dimension_numbers = #tpu.dot_dimension_numbers<[1], [0], [0], [1], [0, 0, 1, 1], [], []>} : vector<2x32xf32>, vector<32x128xf32>, vector<2x128xf32> -> vector<2x128xf32>
    %314 = arith.addf %312, %313 : vector<2x128xf32>
    %315 = arith.negf %314 : vector<2x128xf32>
    %316 = math.exp %315 : vector<2x128xf32>
    %cst_96 = arith.constant 1.000000e+00 : f32
    %317 = vector.broadcast %cst_96 : f32 to vector<2x128xf32>
    %318 = arith.addf %317, %316 : vector<2x128xf32>
    %319 = arith.divf %317, %318 : vector<2x128xf32>
    %320 = math.tanh %314 : vector<2x128xf32>
    %321 = arith.select %5, %320, %319 : vector<2x128xi1>, vector<2x128xf32>
    %322 = vector.extract_strided_slice %321 {offsets = [0, 0], sizes = [2, 32], strides = [1, 1]} : vector<2x128xf32> to vector<2x32xf32>
    %323 = vector.extract_strided_slice %321 {offsets = [0, 32], sizes = [2, 32], strides = [1, 1]} : vector<2x128xf32> to vector<2x32xf32>
    %324 = vector.extract_strided_slice %321 {offsets = [0, 64], sizes = [2, 32], strides = [1, 1]} : vector<2x128xf32> to vector<2x32xf32>
    %325 = vector.extract_strided_slice %321 {offsets = [0, 96], sizes = [2, 32], strides = [1, 1]} : vector<2x128xf32> to vector<2x32xf32>
    %326 = arith.mulf %323, %307 : vector<2x32xf32>
    %327 = arith.mulf %322, %324 : vector<2x32xf32>
    %328 = arith.addf %326, %327 : vector<2x32xf32>
    %329 = math.tanh %328 : vector<2x32xf32>
    %330 = arith.mulf %325, %329 : vector<2x32xf32>
    %c5_i32_97 = arith.constant 5 : i32
    %331 = arith.index_cast %c5_i32_97 : i32 to index
    %c0_98 = arith.constant 0 : index
    %c0_99 = arith.constant 0 : index
    %332 = vector.load %arg10[%331, %c0_98, %c0_99] : memref<8x2x128xf32, #tpu.memory_space<vmem>>, vector<1x2x128xf32>
    %333 = vector.shape_cast %332 : vector<1x2x128xf32> to vector<2x128xf32>
    %cst_100 = arith.constant dense<0.000000e+00> : vector<2x128xf32>
    %334 = tpu.matmul %330, %225, %cst_100 {dimension_numbers = #tpu.dot_dimension_numbers<[1], [0], [0], [1], [0, 0, 1, 1], [], []>} : vector<2x32xf32>, vector<32x128xf32>, vector<2x128xf32> -> vector<2x128xf32>
    %335 = arith.addf %333, %334 : vector<2x128xf32>
    %336 = arith.negf %335 : vector<2x128xf32>
    %337 = math.exp %336 : vector<2x128xf32>
    %cst_101 = arith.constant 1.000000e+00 : f32
    %338 = vector.broadcast %cst_101 : f32 to vector<2x128xf32>
    %339 = arith.addf %338, %337 : vector<2x128xf32>
    %340 = arith.divf %338, %339 : vector<2x128xf32>
    %341 = math.tanh %335 : vector<2x128xf32>
    %342 = arith.select %5, %341, %340 : vector<2x128xi1>, vector<2x128xf32>
    %343 = vector.extract_strided_slice %342 {offsets = [0, 0], sizes = [2, 32], strides = [1, 1]} : vector<2x128xf32> to vector<2x32xf32>
    %344 = vector.extract_strided_slice %342 {offsets = [0, 32], sizes = [2, 32], strides = [1, 1]} : vector<2x128xf32> to vector<2x32xf32>
    %345 = vector.extract_strided_slice %342 {offsets = [0, 64], sizes = [2, 32], strides = [1, 1]} : vector<2x128xf32> to vector<2x32xf32>
    %346 = vector.extract_strided_slice %342 {offsets = [0, 96], sizes = [2, 32], strides = [1, 1]} : vector<2x128xf32> to vector<2x32xf32>
    %347 = arith.mulf %344, %328 : vector<2x32xf32>
    %348 = arith.mulf %343, %345 : vector<2x32xf32>
    %349 = arith.addf %347, %348 : vector<2x32xf32>
    %350 = math.tanh %349 : vector<2x32xf32>
    %351 = arith.mulf %346, %350 : vector<2x32xf32>
    %c6_i32_102 = arith.constant 6 : i32
    %352 = arith.index_cast %c6_i32_102 : i32 to index
    %c0_103 = arith.constant 0 : index
    %c0_104 = arith.constant 0 : index
    %353 = vector.load %arg10[%352, %c0_103, %c0_104] : memref<8x2x128xf32, #tpu.memory_space<vmem>>, vector<1x2x128xf32>
    %354 = vector.shape_cast %353 : vector<1x2x128xf32> to vector<2x128xf32>
    %cst_105 = arith.constant dense<0.000000e+00> : vector<2x128xf32>
    %355 = tpu.matmul %351, %225, %cst_105 {dimension_numbers = #tpu.dot_dimension_numbers<[1], [0], [0], [1], [0, 0, 1, 1], [], []>} : vector<2x32xf32>, vector<32x128xf32>, vector<2x128xf32> -> vector<2x128xf32>
    %356 = arith.addf %354, %355 : vector<2x128xf32>
    %357 = arith.negf %356 : vector<2x128xf32>
    %358 = math.exp %357 : vector<2x128xf32>
    %cst_106 = arith.constant 1.000000e+00 : f32
    %359 = vector.broadcast %cst_106 : f32 to vector<2x128xf32>
    %360 = arith.addf %359, %358 : vector<2x128xf32>
    %361 = arith.divf %359, %360 : vector<2x128xf32>
    %362 = math.tanh %356 : vector<2x128xf32>
    %363 = arith.select %5, %362, %361 : vector<2x128xi1>, vector<2x128xf32>
    %364 = vector.extract_strided_slice %363 {offsets = [0, 0], sizes = [2, 32], strides = [1, 1]} : vector<2x128xf32> to vector<2x32xf32>
    %365 = vector.extract_strided_slice %363 {offsets = [0, 32], sizes = [2, 32], strides = [1, 1]} : vector<2x128xf32> to vector<2x32xf32>
    %366 = vector.extract_strided_slice %363 {offsets = [0, 64], sizes = [2, 32], strides = [1, 1]} : vector<2x128xf32> to vector<2x32xf32>
    %367 = vector.extract_strided_slice %363 {offsets = [0, 96], sizes = [2, 32], strides = [1, 1]} : vector<2x128xf32> to vector<2x32xf32>
    %368 = arith.mulf %365, %349 : vector<2x32xf32>
    %369 = arith.mulf %364, %366 : vector<2x32xf32>
    %370 = arith.addf %368, %369 : vector<2x32xf32>
    %371 = math.tanh %370 : vector<2x32xf32>
    %372 = arith.mulf %367, %371 : vector<2x32xf32>
    %c7_i32_107 = arith.constant 7 : i32
    %373 = arith.index_cast %c7_i32_107 : i32 to index
    %c0_108 = arith.constant 0 : index
    %c0_109 = arith.constant 0 : index
    %374 = vector.load %arg10[%373, %c0_108, %c0_109] : memref<8x2x128xf32, #tpu.memory_space<vmem>>, vector<1x2x128xf32>
    %375 = vector.shape_cast %374 : vector<1x2x128xf32> to vector<2x128xf32>
    %cst_110 = arith.constant dense<0.000000e+00> : vector<2x128xf32>
    %376 = tpu.matmul %372, %225, %cst_110 {dimension_numbers = #tpu.dot_dimension_numbers<[1], [0], [0], [1], [0, 0, 1, 1], [], []>} : vector<2x32xf32>, vector<32x128xf32>, vector<2x128xf32> -> vector<2x128xf32>
    %377 = arith.addf %375, %376 : vector<2x128xf32>
    %378 = arith.negf %377 : vector<2x128xf32>
    %379 = math.exp %378 : vector<2x128xf32>
    %cst_111 = arith.constant 1.000000e+00 : f32
    %380 = vector.broadcast %cst_111 : f32 to vector<2x128xf32>
    %381 = arith.addf %380, %379 : vector<2x128xf32>
    %382 = arith.divf %380, %381 : vector<2x128xf32>
    %383 = math.tanh %377 : vector<2x128xf32>
    %384 = arith.select %5, %383, %382 : vector<2x128xi1>, vector<2x128xf32>
    %385 = vector.extract_strided_slice %384 {offsets = [0, 0], sizes = [2, 32], strides = [1, 1]} : vector<2x128xf32> to vector<2x32xf32>
    %386 = vector.extract_strided_slice %384 {offsets = [0, 32], sizes = [2, 32], strides = [1, 1]} : vector<2x128xf32> to vector<2x32xf32>
    %387 = vector.extract_strided_slice %384 {offsets = [0, 64], sizes = [2, 32], strides = [1, 1]} : vector<2x128xf32> to vector<2x32xf32>
    %388 = vector.extract_strided_slice %384 {offsets = [0, 96], sizes = [2, 32], strides = [1, 1]} : vector<2x128xf32> to vector<2x32xf32>
    %389 = arith.mulf %386, %370 : vector<2x32xf32>
    %390 = arith.mulf %385, %387 : vector<2x32xf32>
    %391 = arith.addf %389, %390 : vector<2x32xf32>
    %392 = math.tanh %391 : vector<2x32xf32>
    %393 = arith.mulf %388, %392 : vector<2x32xf32>
    %c8_i32_112 = arith.constant 8 : i32
    %c0_113 = arith.constant 0 : index
    %c0_114 = arith.constant 0 : index
    %394 = vector.load %arg7[%c0_113, %c0_114] : memref<32x4xf32, #tpu.memory_space<vmem>>, vector<32x4xf32>
    %cst_115 = arith.constant dense<0.000000e+00> : vector<2x4xf32>
    %395 = tpu.matmul %393, %394, %cst_115 {dimension_numbers = #tpu.dot_dimension_numbers<[1], [0], [0], [1], [0, 0, 1, 1], [], []>} : vector<2x32xf32>, vector<32x4xf32>, vector<2x4xf32> -> vector<2x4xf32>
    %c0_116 = arith.constant 0 : index
    %c0_117 = arith.constant 0 : index
    %396 = vector.load %arg8[%c0_116, %c0_117] : memref<1x4xf32, #tpu.memory_space<vmem>>, vector<1x4xf32>
    %397 = vector.broadcast %396 : vector<1x4xf32> to vector<2x4xf32>
    %398 = arith.addf %395, %397 : vector<2x4xf32>
    %c0_118 = arith.constant 0 : index
    %c0_119 = arith.constant 0 : index
    %399 = vector.load %arg9[%c0_118, %c0_119] : memref<2x4xf32, #tpu.memory_space<vmem>>, vector<2x4xf32>
    tpu.vector_store %arg9[%c0_118, %c0_119], %398 {strides = array<i32>} : memref<2x4xf32, #tpu.memory_space<vmem>>, vector<2x4xf32>,
    return
  }
}

</mosaic_0001>

<llo_original>
// kernel: tpu_custom_call.1
$region0: #{tpu_custom_call.1}
  #allocation0 [shape = 'u32[]', space=smem, size = 0x4, offset = 0x4, fixed_abs, tag = 'smem constant byte address 0x4 - core index']
  #allocation1 [shape = 'u32[72,128]{1,0:T(1,128)}', space=vmem, size = 0x9000, scoped, tag = 'internal scratch']
  #allocation2 [shape = 'f32[8,2,128]{2,1,0:T(2,128)}', space=vmem, size = 0x2000, scoped, tag = 'scratch operand']
  #allocation3 [shape = 'f32[8,2,32]{2,1,0:T(2,128)}', space=vmem, size = 0x2000, scoped, tag = 'scratch operand']
  %s0 = inlined_call_operand.hbm [shape: f32[16,16], index: 0, kind: input, shape index: {}]
  %s1 = inlined_call_operand.hbm [shape: f32[16,128], index: 1, kind: input, shape index: {}]
  %s2 = inlined_call_operand.vmem [shape: f32[32,128], index: 2, kind: input, shape index: {}]
  %s3 = inlined_call_operand.vmem [shape: f32[1,128], index: 3, kind: input, shape index: {}]
  %s4 = inlined_call_operand.hbm [shape: f32[32,128], index: 4, kind: input, shape index: {}]
  %s5 = inlined_call_operand.hbm [shape: f32[32,128], index: 5, kind: input, shape index: {}]
  %s6 = inlined_call_operand.vmem [shape: f32[1,128], index: 6, kind: input, shape index: {}]
  %s7 = inlined_call_operand.vmem [shape: f32[32,4], index: 7, kind: input, shape index: {}]
  %s8 = inlined_call_operand.vmem [shape: f32[1,4], index: 8, kind: input, shape index: {}]
  %s9 = inlined_call_operand.hbm [shape: f32[2,4], index: 9, kind: output, shape index: {}]
  %s10 = sld [smem:[#allocation0]]
  $region62: #{tpu_custom_call.1} parent=0
    _
  %s12 = ssub.s32 1, %s10
  %s13 = scalar_select 0, %s12, %s10
  $region1: #{tpu_custom_call.1} parent=0
    #allocation4 [shape = 'u8[8192]{0}', space=vmem, size = 0x2000, scoped, tag = 'input window, operand 0, single buffered']
    #allocation5 [shape = 's32[1]{0}', space=sflag, size = 0x4, scoped, tag = 'scoped memory for tpu_custom_call.1']
    #allocation6 [shape = 's32[1]{0}', space=sflag, size = 0x4, scoped, tag = 'scoped memory for tpu_custom_call.1']
    #allocation7 [shape = 'u8[8192]{0}', space=vmem, size = 0x2000, scoped, tag = 'input window, operand 1, single buffered']
    #allocation8 [shape = 's32[1]{0}', space=sflag, size = 0x4, scoped, tag = 'scoped memory for tpu_custom_call.1']
    #allocation9 [shape = 'u8[16384]{0}', space=vmem, size = 0x4000, scoped, tag = 'input window, operand 4, single buffered']
    #allocation10 [shape = 'u8[16384]{0}', space=vmem, size = 0x4000, scoped, tag = 'input window, operand 5, single buffered']
    #allocation11 [shape = 's32[1]{0}', space=sflag, size = 0x4, scoped, tag = 'scoped memory for tpu_custom_call.1']
    #allocation12 [shape = 'u8[1024]{0}', space=vmem, size = 0x400, scoped, tag = 'output window, operand 0, single buffered']
    %14 = vsyncpa [#allocation5], 0
    %15 = vsyncpa [#allocation8], 0
    %16 = vsyncpa [#allocation11], 0
    %17 = vsyncpa [#allocation6], 0
    // Predicated region
    $region2: #{tpu_custom_call.1} parent=1 // pred_check
      _
    $region3: #{tpu_custom_call.1} parent=1 // pred_check_branch
      %19 = sbr.rel (0) target = $region5
    $region4: #{tpu_custom_call.1} parent=1 // pred_region
      %21 = vsyncadd [#allocation5], 0
      %s22 = sshll.u32 %s0, 4
      %s23 = int_to_ptr.hbm [resolvable:$true] %s22
      %s24 = sshll.u32 [#allocation4], 4
      %s25 = int_to_ptr.vmem [resolvable:$true] %s24
      %30 = dma.hbm_to_vmem [thread:$0]  %s23, 256, %s25, [#allocation5], 128, 128, 8
    $region5: #{tpu_custom_call.1} parent=1 // pred_fallthru
      _
    // Predicated region
    $region6: #{tpu_custom_call.1} parent=1 // pred_check
      _
    $region7: #{tpu_custom_call.1} parent=1 // pred_check_branch
      %32 = sbr.rel (0) target = $region9
    $region8: #{tpu_custom_call.1} parent=1 // pred_region
      %34 = vsyncadd [#allocation8], 0
      %s35 = sshll.u32 %s1, 4
      %s36 = int_to_ptr.hbm [resolvable:$true] %s35
      %s37 = sshll.u32 [#allocation7], 4
      %s38 = int_to_ptr.vmem [resolvable:$true] %s37
      %43 = dma.hbm_to_vmem [thread:$0]  %s36, 256, %s38, [#allocation8], 128, 128, 8
    $region9: #{tpu_custom_call.1} parent=1 // pred_fallthru
      _
    // Predicated region
    $region10: #{tpu_custom_call.1} parent=1 // pred_check
      _
    $region11: #{tpu_custom_call.1} parent=1 // pred_check_branch
      %45 = sbr.rel (0) target = $region13
    $region12: #{tpu_custom_call.1} parent=1 // pred_region
      _
    $region13: #{tpu_custom_call.1} parent=1 // pred_fallthru
      _
    // Predicated region
    $region14: #{tpu_custom_call.1} parent=1 // pred_check
      _
    $region15: #{tpu_custom_call.1} parent=1 // pred_check_branch
      %47 = sbr.rel (0) target = $region17
    $region16: #{tpu_custom_call.1} parent=1 // pred_region
      _
    $region17: #{tpu_custom_call.1} parent=1 // pred_fallthru
      _
    // Predicated region
    $region18: #{tpu_custom_call.1} parent=1 // pred_check
      _
    $region19: #{tpu_custom_call.1} parent=1 // pred_check_branch
      %49 = sbr.rel (0) target = $region21
    $region20: #{tpu_custom_call.1} parent=1 // pred_region
      %51 = vsyncadd [#allocation8], 0
      %s52 = sshll.u32 %s4, 4
      %s53 = int_to_ptr.hbm [resolvable:$true] %s52
      %s54 = sshll.u32 [#allocation9], 4
      %s55 = int_to_ptr.vmem [resolvable:$true] %s54
      %60 = dma.hbm_to_vmem [thread:$0]  %s53, 512, %s55, [#allocation8], 128, 128, 8
    $region21: #{tpu_custom_call.1} parent=1 // pred_fallthru
      _
    // Predicated region
    $region22: #{tpu_custom_call.1} parent=1 // pred_check
      _
    $region23: #{tpu_custom_call.1} parent=1 // pred_check_branch
      %62 = sbr.rel (0) target = $region25
    $region24: #{tpu_custom_call.1} parent=1 // pred_region
      %64 = vsyncadd [#allocation11], 0
      %s65 = sshll.u32 %s5, 4
      %s66 = int_to_ptr.hbm [resolvable:$true] %s65
      %s67 = sshll.u32 [#allocation10], 4
      %s68 = int_to_ptr.vmem [resolvable:$true] %s67
      %73 = dma.hbm_to_vmem [thread:$0]  %s66, 512, %s68, [#allocation11], 128, 128, 8
    $region25: #{tpu_custom_call.1} parent=1 // pred_fallthru
      _
    // Predicated region
    $region26: #{tpu_custom_call.1} parent=1 // pred_check
      _
    $region27: #{tpu_custom_call.1} parent=1 // pred_check_branch
      %75 = sbr.rel (0) target = $region29
    $region28: #{tpu_custom_call.1} parent=1 // pred_region
      _
    $region29: #{tpu_custom_call.1} parent=1 // pred_fallthru
      _
    // Predicated region
    $region30: #{tpu_custom_call.1} parent=1 // pred_check
      _
    $region31: #{tpu_custom_call.1} parent=1 // pred_check_branch
      %77 = sbr.rel (0) target = $region33
    $region32: #{tpu_custom_call.1} parent=1 // pred_region
      _
    $region33: #{tpu_custom_call.1} parent=1 // pred_fallthru
      _
    // Predicated region
    $region34: #{tpu_custom_call.1} parent=1 // pred_check
      _
    $region35: #{tpu_custom_call.1} parent=1 // pred_check_branch
      %79 = sbr.rel (0) target = $region37
    $region36: #{tpu_custom_call.1} parent=1 // pred_region
      _
    $region37: #{tpu_custom_call.1} parent=1 // pred_fallthru
      _
    // Predicated region
    $region38: #{tpu_custom_call.1} parent=1 // pred_check
      _
    $region39: #{tpu_custom_call.1} parent=1 // pred_check_branch
      %81 = sbr.rel (0) target = $region41
    $region40: #{tpu_custom_call.1} parent=1 // pred_region
      %83 = dma.done [#allocation5], 256
    $region41: #{tpu_custom_call.1} parent=1 // pred_fallthru
      _
    // Predicated region
    $region42: #{tpu_custom_call.1} parent=1 // pred_check
      _
    $region43: #{tpu_custom_call.1} parent=1 // pred_check_branch
      %85 = sbr.rel (0) target = $region45
    $region44: #{tpu_custom_call.1} parent=1 // pred_region
      %87 = dma.done [#allocation8], 256
    $region45: #{tpu_custom_call.1} parent=1 // pred_fallthru
      _
    // Predicated region
    $region46: #{tpu_custom_call.1} parent=1 // pred_check
      _
    $region47: #{tpu_custom_call.1} parent=1 // pred_check_branch
      %89 = sbr.rel (0) target = $region49
    $region48: #{tpu_custom_call.1} parent=1 // pred_region
      %91 = dma.done [#allocation8], 512
    $region49: #{tpu_custom_call.1} parent=1 // pred_fallthru
      _
    // Predicated region
    $region50: #{tpu_custom_call.1} parent=1 // pred_check
      _
    $region51: #{tpu_custom_call.1} parent=1 // pred_check_branch
      %93 = sbr.rel (0) target = $region53
    $region52: #{tpu_custom_call.1} parent=1 // pred_region
      %95 = dma.done [#allocation11], 512
    $region53: #{tpu_custom_call.1} parent=1 // pred_fallthru
      _
    %v96 = vlaneseq
    %v97 = vand.u32 %v96, 127
    %vm98 = vcmp.ge.s32.totalorder %v97, 64
    %vm99 = vcmp.lt.s32.totalorder %v97, 96
    %vm100 = vmand %vm98, %vm99
    %v101 = vld [vmem:[#allocation4] sm:$0xff]
    %v102 = vld [vmem:[#allocation4 + $0x8] sm:$0xff]
    %v103 = vld [vmem:[#allocation7] sm:$0xff]
    %v104 = vld [vmem:[#allocation7 + $0x8] sm:$0xff]
    %v105 = vld [vmem:[%s3] sm:$0x1]
    %v107 = vperm.slane %v105, 0
    %vm109 = vcmask 130048
    %v111 = vsel %vm109, %v101, 0
    %v114 = vsel %vm109, %v102, 0
    %116 = vmatpush.msra.mxu0 0.0
    %117 = vmatpush.msra.mxu0 0.0
    %118 = vmatpush.msra.mxu0 0.0
    %119 = vmatpush.msra.mxu0 0.0
    %120 = vmatpush.msra.mxu0 0.0
    %121 = vmatpush.msra.mxu0 0.0
    %122 = vmatpush.msra.mxu0 0.0
    %123 = vmatpush.msra.mxu0 0.0
    %124 = vmatpush.msra.mxu0 0.0
    %125 = vmatpush.msra.mxu0 0.0
    %126 = vmatpush.msra.mxu0 0.0
    %127 = vmatpush.msra.mxu0 0.0
    %128 = vmatpush.msra.mxu0 0.0
    %129 = vmatpush.msra.mxu0 0.0
    %130 = vmatpush.msra.mxu0 %v104
    %131 = vmatpush.msra.mxu0 %v103
    %132 = vmatmul.f32.gmra.mxu0 %v111
    %v133 = vpop.f32.mrf.mxu0
    %v134 = vadd.f32 %v107, %v133
    %135 = vmatmul.f32.gmra.mxu0 %v114
    %v136 = vpop.f32.mrf.mxu0
    %v137 = vadd.f32 %v107, %v136
    %138 = vdwg.mxu0
    %v141 = vrot.slane %v134, 2
    %v142 = vrot.slane %v134, 4
    %v143 = vrot.slane %v134, 6
    %v144 = vrot.slane %v137, 2
    %v145 = vrot.slane %v137, 4
    %v146 = vrot.slane %v137, 6
    %153 = vst [vmem:[#allocation2] sm:$0x3] %v134
    %154 = vst [vmem:[#allocation2 + $0x2] sm:$0x3] %v141
    %155 = vst [vmem:[#allocation2 + $0x4] sm:$0x3] %v142
    %156 = vst [vmem:[#allocation2 + $0x6] sm:$0x3] %v143
    %157 = vst [vmem:[#allocation2 + $0x8] sm:$0x3] %v137
    %158 = vst [vmem:[#allocation2 + $0xa] sm:$0x3] %v144
    %159 = vst [vmem:[#allocation2 + $0xc] sm:$0x3] %v145
    %160 = vst [vmem:[#allocation2 + $0xe] sm:$0x3] %v146
    %v161 = vld [vmem:[%s2] sm:$0xff]
    %v162 = vld [vmem:[%s2 + $0x8] sm:$0xff]
    %v163 = vld [vmem:[%s2 + $0x10] sm:$0xff]
    %v164 = vld [vmem:[%s2 + $0x18] sm:$0xff]
    %v165 = vld [vmem:[#allocation2] sm:$0x3]
    %vm166 = vcmask 261120
    %v168 = vsel %vm166, 0.0, 0
    %170 = vmatpush.msra.mxu0 0.0
    %171 = vmatpush.msra.mxu0 0.0
    %172 = vmatpush.msra.mxu0 0.0
    %173 = vmatpush.msra.mxu0 0.0
    %174 = vmatpush.msra.mxu0 0.0
    %175 = vmatpush.msra.mxu0 0.0
    %176 = vmatpush.msra.mxu0 0.0
    %177 = vmatpush.msra.mxu0 0.0
    %178 = vmatpush.msra.mxu0 0.0
    %179 = vmatpush.msra.mxu0 0.0
    %180 = vmatpush.msra.mxu0 0.0
    %181 = vmatpush.msra.mxu0 0.0
    %182 = vmatpush.msra.mxu0 %v164
    %183 = vmatpush.msra.mxu0 %v163
    %184 = vmatpush.msra.mxu0 %v162
    %185 = vmatpush.msra.mxu0 %v161
    %186 = vmatmul.f32.gmra.mxu0 %v168
    %v187 = vpop.f32.mrf.mxu0
    %v188 = vadd.f32 0.0, %v187
    %189 = vdwg.mxu0
    %v190 = vadd.f32 %v165, %v188
    %v191 = vxor.u32 %v190, 2147483648
    %v192 = vmul.f32 %v191, 1.442695
    %v193 = vpow.pop %v192
    %v194 = vadd.f32 %v193, 1.0
    %v195 = vrcp.pop %v194
    %v196 = vmul.f32 %v194, %v195
    %v197 = vsub.f32 1.0, %v196
    %v198 = vmul.f32 %v195, %v197
    %v199 = vadd.f32 %v195, %v198
    %vm200 = vweird.f32 %v194
    %vm201 = vweird.f32 %v195
    %vm202 = vmor %vm200, %vm201
    %v203 = vsel %vm202, %v195, %v199
    %v204 = vand.u32 2147483647, %v194
    %vm205 = vcmp.eq.f32.partialorder %v204, 8.507059e+37
    %v206 = vand.u32 %v194, 2147483648
    %v207 = vor.u32 1.1754944e-38, %v206
    %v208 = vsel %vm205, %v207, %v203
    %v209 = vmul.f32 1.0, %v208
    %v210 = vtanh.pop %v190
    %v211 = vsel %vm100, %v210, %v209
    %v212 = vmul.f32 %v211, 0.0
    %214 = vrot.lane.b32.xlu0 %v211, 64
    %v215 = vpop.permute.xlu0 %214
    %v217 = vmul.f32 %v211, %v215
    %219 = vrot.lane.b32.xlu0 %v217, 32
    %v220 = vpop.permute.xlu0 %219
    %v222 = vadd.f32 %v212, %v220
    %v223 = vtanh.pop %v222
    %225 = vrot.lane.b32.xlu0 %v223, 64
    %v226 = vpop.permute.xlu0 %225
    %v228 = vmul.f32 %v211, %v226
    %230 = vrot.lane.b32.xlu0 %v228, 32
    %v231 = vpop.permute.xlu0 %230
    %vm233 = vcmask 254976
    %234 = vst.msk [vmem:[#allocation3] sm:$0x3] %vm233, %v231
    %s235 = scalar_lea.vmem [#allocation2], 2
    %v236 = vld [vmem:[%s235] sm:$0x3]
    %v237 = vsel %vm166, %v231, 0
    %239 = vmatpush.msra.mxu0 0.0
    %240 = vmatpush.msra.mxu0 0.0
    %241 = vmatpush.msra.mxu0 0.0
    %242 = vmatpush.msra.mxu0 0.0
    %243 = vmatpush.msra.mxu0 0.0
    %244 = vmatpush.msra.mxu0 0.0
    %245 = vmatpush.msra.mxu0 0.0
    %246 = vmatpush.msra.mxu0 0.0
    %247 = vmatpush.msra.mxu0 0.0
    %248 = vmatpush.msra.mxu0 0.0
    %249 = vmatpush.msra.mxu0 0.0
    %250 = vmatpush.msra.mxu0 0.0
    %251 = vmatpush.msra.mxu0 %v164
    %252 = vmatpush.msra.mxu0 %v163
    %253 = vmatpush.msra.mxu0 %v162
    %254 = vmatpush.msra.mxu0 %v161
    %255 = vmatmul.f32.gmra.mxu0 %v237
    %v256 = vpop.f32.mrf.mxu0
    %v257 = vadd.f32 0.0, %v256
    %258 = vdwg.mxu0
    %v259 = vadd.f32 %v236, %v257
    %v260 = vxor.u32 %v259, 2147483648
    %v261 = vmul.f32 %v260, 1.442695
    %v262 = vpow.pop %v261
    %v263 = vadd.f32 %v262, 1.0
    %v264 = vrcp.pop %v263
    %v265 = vmul.f32 %v263, %v264
    %v266 = vsub.f32 1.0, %v265
    %v267 = vmul.f32 %v264, %v266
    %v268 = vadd.f32 %v264, %v267
    %vm269 = vweird.f32 %v263
    %vm270 = vweird.f32 %v264
    %vm271 = vmor %vm269, %vm270
    %v272 = vsel %vm271, %v264, %v268
    %v273 = vand.u32 2147483647, %v263
    %vm274 = vcmp.eq.f32.partialorder %v273, 8.507059e+37
    %v275 = vand.u32 %v263, 2147483648
    %v276 = vor.u32 1.1754944e-38, %v275
    %v277 = vsel %vm274, %v276, %v272
    %v278 = vmul.f32 1.0, %v277
    %v279 = vtanh.pop %v259
    %v280 = vsel %vm100, %v279, %v278
    %v281 = vmul.f32 %v280, %v222
    %283 = vrot.lane.b32.xlu0 %v280, 64
    %v284 = vpop.permute.xlu0 %283
    %v286 = vmul.f32 %v280, %v284
    %288 = vrot.lane.b32.xlu0 %v286, 32
    %v289 = vpop.permute.xlu0 %288
    %v291 = vadd.f32 %v281, %v289
    %v292 = vtanh.pop %v291
    %294 = vrot.lane.b32.xlu0 %v292, 64
    %v295 = vpop.permute.xlu0 %294
    %v297 = vmul.f32 %v280, %v295
    %299 = vrot.lane.b32.xlu0 %v297, 32
    %v300 = vpop.permute.xlu0 %299
    %s302 = scalar_lea.vmem [#allocation3], 2
    %303 = vst.msk [vmem:[%s302] sm:$0x3] %vm233, %v300
    %s304 = scalar_lea.vmem [#allocation2], 4
    %v305 = vld [vmem:[%s304] sm:$0x3]
    %v306 = vsel %vm166, %v300, 0
    %308 = vmatpush.msra.mxu0 0.0
    %309 = vmatpush.msra.mxu0 0.0
    %310 = vmatpush.msra.mxu0 0.0
    %311 = vmatpush.msra.mxu0 0.0
    %312 = vmatpush.msra.mxu0 0.0
    %313 = vmatpush.msra.mxu0 0.0
    %314 = vmatpush.msra.mxu0 0.0
    %315 = vmatpush.msra.mxu0 0.0
    %316 = vmatpush.msra.mxu0 0.0
    %317 = vmatpush.msra.mxu0 0.0
    %318 = vmatpush.msra.mxu0 0.0
    %319 = vmatpush.msra.mxu0 0.0
    %320 = vmatpush.msra.mxu0 %v164
    %321 = vmatpush.msra.mxu0 %v163
    %322 = vmatpush.msra.mxu0 %v162
    %323 = vmatpush.msra.mxu0 %v161
    %324 = vmatmul.f32.gmra.mxu0 %v306
    %v325 = vpop.f32.mrf.mxu0
    %v326 = vadd.f32 0.0, %v325
    %327 = vdwg.mxu0
    %v328 = vadd.f32 %v305, %v326
    %v329 = vxor.u32 %v328, 2147483648
    %v330 = vmul.f32 %v329, 1.442695
    %v331 = vpow.pop %v330
    %v332 = vadd.f32 %v331, 1.0
    %v333 = vrcp.pop %v332
    %v334 = vmul.f32 %v332, %v333
    %v335 = vsub.f32 1.0, %v334
    %v336 = vmul.f32 %v333, %v335
    %v337 = vadd.f32 %v333, %v336
    %vm338 = vweird.f32 %v332
    %vm339 = vweird.f32 %v333
    %vm340 = vmor %vm338, %vm339
    %v341 = vsel %vm340, %v333, %v337
    %v342 = vand.u32 2147483647, %v332
    %vm343 = vcmp.eq.f32.partialorder %v342, 8.507059e+37
    %v344 = vand.u32 %v332, 2147483648
    %v345 = vor.u32 1.1754944e-38, %v344
    %v346 = vsel %vm343, %v345, %v341
    %v347 = vmul.f32 1.0, %v346
    %v348 = vtanh.pop %v328
    %v349 = vsel %vm100, %v348, %v347
    %v350 = vmul.f32 %v349, %v291
    %352 = vrot.lane.b32.xlu0 %v349, 64
    %v353 = vpop.permute.xlu0 %352
    %v355 = vmul.f32 %v349, %v353
    %357 = vrot.lane.b32.xlu0 %v355, 32
    %v358 = vpop.permute.xlu0 %357
    %v360 = vadd.f32 %v350, %v358
    %v361 = vtanh.pop %v360
    %363 = vrot.lane.b32.xlu0 %v361, 64
    %v364 = vpop.permute.xlu0 %363
    %v366 = vmul.f32 %v349, %v364
    %368 = vrot.lane.b32.xlu0 %v366, 32
    %v369 = vpop.permute.xlu0 %368
    %s371 = scalar_lea.vmem [#allocation3], 4
    %372 = vst.msk [vmem:[%s371] sm:$0x3] %vm233, %v369
    %s373 = scalar_lea.vmem [#allocation2], 6
    %v374 = vld [vmem:[%s373] sm:$0x3]
    %v375 = vsel %vm166, %v369, 0
    %377 = vmatpush.msra.mxu0 0.0
    %378 = vmatpush.msra.mxu0 0.0
    %379 = vmatpush.msra.mxu0 0.0
    %380 = vmatpush.msra.mxu0 0.0
    %381 = vmatpush.msra.mxu0 0.0
    %382 = vmatpush.msra.mxu0 0.0
    %383 = vmatpush.msra.mxu0 0.0
    %384 = vmatpush.msra.mxu0 0.0
    %385 = vmatpush.msra.mxu0 0.0
    %386 = vmatpush.msra.mxu0 0.0
    %387 = vmatpush.msra.mxu0 0.0
    %388 = vmatpush.msra.mxu0 0.0
    %389 = vmatpush.msra.mxu0 %v164
    %390 = vmatpush.msra.mxu0 %v163
    %391 = vmatpush.msra.mxu0 %v162
    %392 = vmatpush.msra.mxu0 %v161
    %393 = vmatmul.f32.gmra.mxu0 %v375
    %v394 = vpop.f32.mrf.mxu0
    %v395 = vadd.f32 0.0, %v394
    %396 = vdwg.mxu0
    %v397 = vadd.f32 %v374, %v395
    %v398 = vxor.u32 %v397, 2147483648
    %v399 = vmul.f32 %v398, 1.442695
    %v400 = vpow.pop %v399
    %v401 = vadd.f32 %v400, 1.0
    %v402 = vrcp.pop %v401
    %v403 = vmul.f32 %v401, %v402
    %v404 = vsub.f32 1.0, %v403
    %v405 = vmul.f32 %v402, %v404
    %v406 = vadd.f32 %v402, %v405
    %vm407 = vweird.f32 %v401
    %vm408 = vweird.f32 %v402
    %vm409 = vmor %vm407, %vm408
    %v410 = vsel %vm409, %v402, %v406
    %v411 = vand.u32 2147483647, %v401
    %vm412 = vcmp.eq.f32.partialorder %v411, 8.507059e+37
    %v413 = vand.u32 %v401, 2147483648
    %v414 = vor.u32 1.1754944e-38, %v413
    %v415 = vsel %vm412, %v414, %v410
    %v416 = vmul.f32 1.0, %v415
    %v417 = vtanh.pop %v397
    %v418 = vsel %vm100, %v417, %v416
    %v419 = vmul.f32 %v418, %v360
    %421 = vrot.lane.b32.xlu0 %v418, 64
    %v422 = vpop.permute.xlu0 %421
    %v424 = vmul.f32 %v418, %v422
    %426 = vrot.lane.b32.xlu0 %v424, 32
    %v427 = vpop.permute.xlu0 %426
    %v429 = vadd.f32 %v419, %v427
    %v430 = vtanh.pop %v429
    %432 = vrot.lane.b32.xlu0 %v430, 64
    %v433 = vpop.permute.xlu0 %432
    %v435 = vmul.f32 %v418, %v433
    %437 = vrot.lane.b32.xlu0 %v435, 32
    %v438 = vpop.permute.xlu0 %437
    %s440 = scalar_lea.vmem [#allocation3], 6
    %441 = vst.msk [vmem:[%s440] sm:$0x3] %vm233, %v438
    %s442 = scalar_lea.vmem [#allocation2], 8
    %v443 = vld [vmem:[%s442] sm:$0x3]
    %v444 = vsel %vm166, %v438, 0
    %446 = vmatpush.msra.mxu0 0.0
    %447 = vmatpush.msra.mxu0 0.0
    %448 = vmatpush.msra.mxu0 0.0
    %449 = vmatpush.msra.mxu0 0.0
    %450 = vmatpush.msra.mxu0 0.0
    %451 = vmatpush.msra.mxu0 0.0
    %452 = vmatpush.msra.mxu0 0.0
    %453 = vmatpush.msra.mxu0 0.0
    %454 = vmatpush.msra.mxu0 0.0
    %455 = vmatpush.msra.mxu0 0.0
    %456 = vmatpush.msra.mxu0 0.0
    %457 = vmatpush.msra.mxu0 0.0
    %458 = vmatpush.msra.mxu0 %v164
    %459 = vmatpush.msra.mxu0 %v163
    %460 = vmatpush.msra.mxu0 %v162
    %461 = vmatpush.msra.mxu0 %v161
    %462 = vmatmul.f32.gmra.mxu0 %v444
    %v463 = vpop.f32.mrf.mxu0
    %v464 = vadd.f32 0.0, %v463
    %465 = vdwg.mxu0
    %v466 = vadd.f32 %v443, %v464
    %v467 = vxor.u32 %v466, 2147483648
    %v468 = vmul.f32 %v467, 1.442695
    %v469 = vpow.pop %v468
    %v470 = vadd.f32 %v469, 1.0
    %v471 = vrcp.pop %v470
    %v472 = vmul.f32 %v470, %v471
    %v473 = vsub.f32 1.0, %v472
    %v474 = vmul.f32 %v471, %v473
    %v475 = vadd.f32 %v471, %v474
    %vm476 = vweird.f32 %v470
    %vm477 = vweird.f32 %v471
    %vm478 = vmor %vm476, %vm477
    %v479 = vsel %vm478, %v471, %v475
    %v480 = vand.u32 2147483647, %v470
    %vm481 = vcmp.eq.f32.partialorder %v480, 8.507059e+37
    %v482 = vand.u32 %v470, 2147483648
    %v483 = vor.u32 1.1754944e-38, %v482
    %v484 = vsel %vm481, %v483, %v479
    %v485 = vmul.f32 1.0, %v484
    %v486 = vtanh.pop %v466
    %v487 = vsel %vm100, %v486, %v485
    %v488 = vmul.f32 %v487, %v429
    %490 = vrot.lane.b32.xlu0 %v487, 64
    %v491 = vpop.permute.xlu0 %490
    %v493 = vmul.f32 %v487, %v491
    %495 = vrot.lane.b32.xlu0 %v493, 32
    %v496 = vpop.permute.xlu0 %495
    %v498 = vadd.f32 %v488, %v496
    %v499 = vtanh.pop %v498
    %501 = vrot.lane.b32.xlu0 %v499, 64
    %v502 = vpop.permute.xlu0 %501
    %v504 = vmul.f32 %v487, %v502
    %506 = vrot.lane.b32.xlu0 %v504, 32
    %v507 = vpop.permute.xlu0 %506
    %s509 = scalar_lea.vmem [#allocation3], 8
    %510 = vst.msk [vmem:[%s509] sm:$0x3] %vm233, %v507
    %s511 = scalar_lea.vmem [#allocation2], 10
    %v512 = vld [vmem:[%s511] sm:$0x3]
    %v513 = vsel %vm166, %v507, 0
    %515 = vmatpush.msra.mxu0 0.0
    %516 = vmatpush.msra.mxu0 0.0
    %517 = vmatpush.msra.mxu0 0.0
    %518 = vmatpush.msra.mxu0 0.0
    %519 = vmatpush.msra.mxu0 0.0
    %520 = vmatpush.msra.mxu0 0.0
    %521 = vmatpush.msra.mxu0 0.0
    %522 = vmatpush.msra.mxu0 0.0
    %523 = vmatpush.msra.mxu0 0.0
    %524 = vmatpush.msra.mxu0 0.0
    %525 = vmatpush.msra.mxu0 0.0
    %526 = vmatpush.msra.mxu0 0.0
    %527 = vmatpush.msra.mxu0 %v164
    %528 = vmatpush.msra.mxu0 %v163
    %529 = vmatpush.msra.mxu0 %v162
    %530 = vmatpush.msra.mxu0 %v161
    %531 = vmatmul.f32.gmra.mxu0 %v513
    %v532 = vpop.f32.mrf.mxu0
    %v533 = vadd.f32 0.0, %v532
    %534 = vdwg.mxu0
    %v535 = vadd.f32 %v512, %v533
    %v536 = vxor.u32 %v535, 2147483648
    %v537 = vmul.f32 %v536, 1.442695
    %v538 = vpow.pop %v537
    %v539 = vadd.f32 %v538, 1.0
    %v540 = vrcp.pop %v539
    %v541 = vmul.f32 %v539, %v540
    %v542 = vsub.f32 1.0, %v541
    %v543 = vmul.f32 %v540, %v542
    %v544 = vadd.f32 %v540, %v543
    %vm545 = vweird.f32 %v539
    %vm546 = vweird.f32 %v540
    %vm547 = vmor %vm545, %vm546
    %v548 = vsel %vm547, %v540, %v544
    %v549 = vand.u32 2147483647, %v539
    %vm550 = vcmp.eq.f32.partialorder %v549, 8.507059e+37
    %v551 = vand.u32 %v539, 2147483648
    %v552 = vor.u32 1.1754944e-38, %v551
    %v553 = vsel %vm550, %v552, %v548
    %v554 = vmul.f32 1.0, %v553
    %v555 = vtanh.pop %v535
    %v556 = vsel %vm100, %v555, %v554
    %v557 = vmul.f32 %v556, %v498
    %559 = vrot.lane.b32.xlu0 %v556, 64
    %v560 = vpop.permute.xlu0 %559
    %v562 = vmul.f32 %v556, %v560
    %564 = vrot.lane.b32.xlu0 %v562, 32
    %v565 = vpop.permute.xlu0 %564
    %v567 = vadd.f32 %v557, %v565
    %v568 = vtanh.pop %v567
    %570 = vrot.lane.b32.xlu0 %v568, 64
    %v571 = vpop.permute.xlu0 %570
    %v573 = vmul.f32 %v556, %v571
    %575 = vrot.lane.b32.xlu0 %v573, 32
    %v576 = vpop.permute.xlu0 %575
    %s578 = scalar_lea.vmem [#allocation3], 10
    %579 = vst.msk [vmem:[%s578] sm:$0x3] %vm233, %v576
    %s580 = scalar_lea.vmem [#allocation2], 12
    %v581 = vld [vmem:[%s580] sm:$0x3]
    %v582 = vsel %vm166, %v576, 0
    %584 = vmatpush.msra.mxu0 0.0
    %585 = vmatpush.msra.mxu0 0.0
    %586 = vmatpush.msra.mxu0 0.0
    %587 = vmatpush.msra.mxu0 0.0
    %588 = vmatpush.msra.mxu0 0.0
    %589 = vmatpush.msra.mxu0 0.0
    %590 = vmatpush.msra.mxu0 0.0
    %591 = vmatpush.msra.mxu0 0.0
    %592 = vmatpush.msra.mxu0 0.0
    %593 = vmatpush.msra.mxu0 0.0
    %594 = vmatpush.msra.mxu0 0.0
    %595 = vmatpush.msra.mxu0 0.0
    %596 = vmatpush.msra.mxu0 %v164
    %597 = vmatpush.msra.mxu0 %v163
    %598 = vmatpush.msra.mxu0 %v162
    %599 = vmatpush.msra.mxu0 %v161
    %600 = vmatmul.f32.gmra.mxu0 %v582
    %v601 = vpop.f32.mrf.mxu0
    %v602 = vadd.f32 0.0, %v601
    %603 = vdwg.mxu0
    %v604 = vadd.f32 %v581, %v602
    %v605 = vxor.u32 %v604, 2147483648
    %v606 = vmul.f32 %v605, 1.442695
    %v607 = vpow.pop %v606
    %v608 = vadd.f32 %v607, 1.0
    %v609 = vrcp.pop %v608
    %v610 = vmul.f32 %v608, %v609
    %v611 = vsub.f32 1.0, %v610
    %v612 = vmul.f32 %v609, %v611
    %v613 = vadd.f32 %v609, %v612
    %vm614 = vweird.f32 %v608
    %vm615 = vweird.f32 %v609
    %vm616 = vmor %vm614, %vm615
    %v617 = vsel %vm616, %v609, %v613
    %v618 = vand.u32 2147483647, %v608
    %vm619 = vcmp.eq.f32.partialorder %v618, 8.507059e+37
    %v620 = vand.u32 %v608, 2147483648
    %v621 = vor.u32 1.1754944e-38, %v620
    %v622 = vsel %vm619, %v621, %v617
    %v623 = vmul.f32 1.0, %v622
    %v624 = vtanh.pop %v604
    %v625 = vsel %vm100, %v624, %v623
    %v626 = vmul.f32 %v625, %v567
    %628 = vrot.lane.b32.xlu0 %v625, 64
    %v629 = vpop.permute.xlu0 %628
    %v631 = vmul.f32 %v625, %v629
    %633 = vrot.lane.b32.xlu0 %v631, 32
    %v634 = vpop.permute.xlu0 %633
    %v636 = vadd.f32 %v626, %v634
    %v637 = vtanh.pop %v636
    %639 = vrot.lane.b32.xlu0 %v637, 64
    %v640 = vpop.permute.xlu0 %639
    %v642 = vmul.f32 %v625, %v640
    %644 = vrot.lane.b32.xlu0 %v642, 32
    %v645 = vpop.permute.xlu0 %644
    %s647 = scalar_lea.vmem [#allocation3], 12
    %648 = vst.msk [vmem:[%s647] sm:$0x3] %vm233, %v645
    %s649 = scalar_lea.vmem [#allocation2], 14
    %v650 = vld [vmem:[%s649] sm:$0x3]
    %v651 = vsel %vm166, %v645, 0
    %653 = vmatpush.msra.mxu0 0.0
    %654 = vmatpush.msra.mxu0 0.0
    %655 = vmatpush.msra.mxu0 0.0
    %656 = vmatpush.msra.mxu0 0.0
    %657 = vmatpush.msra.mxu0 0.0
    %658 = vmatpush.msra.mxu0 0.0
    %659 = vmatpush.msra.mxu0 0.0
    %660 = vmatpush.msra.mxu0 0.0
    %661 = vmatpush.msra.mxu0 0.0
    %662 = vmatpush.msra.mxu0 0.0
    %663 = vmatpush.msra.mxu0 0.0
    %664 = vmatpush.msra.mxu0 0.0
    %665 = vmatpush.msra.mxu0 %v164
    %666 = vmatpush.msra.mxu0 %v163
    %667 = vmatpush.msra.mxu0 %v162
    %668 = vmatpush.msra.mxu0 %v161
    %669 = vmatmul.f32.gmra.mxu0 %v651
    %v670 = vpop.f32.mrf.mxu0
    %v671 = vadd.f32 0.0, %v670
    %672 = vdwg.mxu0
    %v673 = vadd.f32 %v650, %v671
    %v674 = vxor.u32 %v673, 2147483648
    %v675 = vmul.f32 %v674, 1.442695
    %v676 = vpow.pop %v675
    %v677 = vadd.f32 %v676, 1.0
    %v678 = vrcp.pop %v677
    %v679 = vmul.f32 %v677, %v678
    %v680 = vsub.f32 1.0, %v679
    %v681 = vmul.f32 %v678, %v680
    %v682 = vadd.f32 %v678, %v681
    %vm683 = vweird.f32 %v677
    %vm684 = vweird.f32 %v678
    %vm685 = vmor %vm683, %vm684
    %v686 = vsel %vm685, %v678, %v682
    %v687 = vand.u32 2147483647, %v677
    %vm688 = vcmp.eq.f32.partialorder %v687, 8.507059e+37
    %v689 = vand.u32 %v677, 2147483648
    %v690 = vor.u32 1.1754944e-38, %v689
    %v691 = vsel %vm688, %v690, %v686
    %v692 = vmul.f32 1.0, %v691
    %v693 = vtanh.pop %v673
    %v694 = vsel %vm100, %v693, %v692
    %v695 = vmul.f32 %v694, %v636
    %697 = vrot.lane.b32.xlu0 %v694, 64
    %v698 = vpop.permute.xlu0 %697
    %v700 = vmul.f32 %v694, %v698
    %702 = vrot.lane.b32.xlu0 %v700, 32
    %v703 = vpop.permute.xlu0 %702
    %v705 = vadd.f32 %v695, %v703
    %v706 = vtanh.pop %v705
    %708 = vrot.lane.b32.xlu0 %v706, 64
    %v709 = vpop.permute.xlu0 %708
    %v711 = vmul.f32 %v694, %v709
    %713 = vrot.lane.b32.xlu0 %v711, 32
    %v714 = vpop.permute.xlu0 %713
    %s716 = scalar_lea.vmem [#allocation3], 14
    %717 = vst.msk [vmem:[%s716] sm:$0x3] %vm233, %v714
    %v718 = vld [vmem:[#allocation3] sm:$0x3]
    %v719 = vld [vmem:[#allocation3 + $0x2] sm:$0x3]
    %v720 = vld [vmem:[#allocation3 + $0x4] sm:$0x3]
    %v721 = vld [vmem:[#allocation3 + $0x6] sm:$0x3]
    %v722 = vld [vmem:[#allocation3 + $0x8] sm:$0x3]
    %v723 = vld [vmem:[#allocation3 + $0xa] sm:$0x3]
    %v724 = vld [vmem:[#allocation3 + $0xc] sm:$0x3]
    %v725 = vld [vmem:[#allocation3 + $0xe] sm:$0x3]
    %v726 = vld [vmem:[#allocation9] sm:$0xff]
    %v727 = vld [vmem:[#allocation9 + $0x8] sm:$0xff]
    %v728 = vld [vmem:[#allocation9 + $0x10] sm:$0xff]
    %v729 = vld [vmem:[#allocation9 + $0x18] sm:$0xff]
    %v730 = vld [vmem:[%s6] sm:$0x1]
    %v732 = vperm.slane %v730, 0
    %742 = vst [vmem:[#allocation1] ss:$4 sm:$0xff] %v718
    %s743 = scalar_lea.vmem [#allocation1], 1
    %744 = vst [vmem:[%s743] ss:$4 sm:$0xff] %v719
    %s745 = scalar_lea.vmem [#allocation1], 2
    %746 = vst [vmem:[%s745] ss:$4 sm:$0xff] %v720
    %s747 = scalar_lea.vmem [#allocation1], 3
    %748 = vst [vmem:[%s747] ss:$4 sm:$0xff] %v721
    %s749 = scalar_lea.vmem [#allocation1], 32
    %750 = vst [vmem:[%s749] ss:$4 sm:$0xff] %v722
    %s751 = scalar_lea.vmem [#allocation1], 33
    %752 = vst [vmem:[%s751] ss:$4 sm:$0xff] %v723
    %s753 = scalar_lea.vmem [#allocation1], 34
    %754 = vst [vmem:[%s753] ss:$4 sm:$0xff] %v724
    %s755 = scalar_lea.vmem [#allocation1], 35
    %756 = vst [vmem:[%s755] ss:$4 sm:$0xff] %v725
    %v757 = vld.sshfl [vmem:[#allocation1] sm:$0xff pattern:$0x73625140]
    %v758 = vld.sshfl [vmem:[#allocation1 + $0x20] sm:$0xff pattern:$0x73625140]
    %v759 = vsel %vm166, %v757, 0
    %v761 = vsel %vm166, %v758, 0
    %763 = vmatpush.msra.mxu0 0.0
    %764 = vmatpush.msra.mxu0 0.0
    %765 = vmatpush.msra.mxu0 0.0
    %766 = vmatpush.msra.mxu0 0.0
    %767 = vmatpush.msra.mxu0 0.0
    %768 = vmatpush.msra.mxu0 0.0
    %769 = vmatpush.msra.mxu0 0.0
    %770 = vmatpush.msra.mxu0 0.0
    %771 = vmatpush.msra.mxu0 0.0
    %772 = vmatpush.msra.mxu0 0.0
    %773 = vmatpush.msra.mxu0 0.0
    %774 = vmatpush.msra.mxu0 0.0
    %775 = vmatpush.msra.mxu0 %v729
    %776 = vmatpush.msra.mxu0 %v728
    %777 = vmatpush.msra.mxu0 %v727
    %778 = vmatpush.msra.mxu0 %v726
    %779 = vmatmul.f32.gmra.mxu0 %v759
    %v780 = vpop.f32.mrf.mxu0
    %v781 = vadd.f32 %v732, %v780
    %782 = vmatmul.f32.gmra.mxu0 %v761
    %v783 = vpop.f32.mrf.mxu0
    %v784 = vadd.f32 %v732, %v783
    %785 = vdwg.mxu0
    %v788 = vrot.slane %v781, 2
    %v789 = vrot.slane %v781, 4
    %v790 = vrot.slane %v781, 6
    %v791 = vrot.slane %v784, 2
    %v792 = vrot.slane %v784, 4
    %v793 = vrot.slane %v784, 6
    %800 = vst [vmem:[#allocation2] sm:$0x3] %v781
    %801 = vst [vmem:[#allocation2 + $0x2] sm:$0x3] %v788
    %802 = vst [vmem:[#allocation2 + $0x4] sm:$0x3] %v789
    %803 = vst [vmem:[#allocation2 + $0x6] sm:$0x3] %v790
    %804 = vst [vmem:[#allocation2 + $0x8] sm:$0x3] %v784
    %805 = vst [vmem:[#allocation2 + $0xa] sm:$0x3] %v791
    %806 = vst [vmem:[#allocation2 + $0xc] sm:$0x3] %v792
    %807 = vst [vmem:[#allocation2 + $0xe] sm:$0x3] %v793
    %v808 = vld [vmem:[#allocation10] sm:$0xff]
    %v809 = vld [vmem:[#allocation10 + $0x8] sm:$0xff]
    %v810 = vld [vmem:[#allocation10 + $0x10] sm:$0xff]
    %v811 = vld [vmem:[#allocation10 + $0x18] sm:$0xff]
    %v812 = vld [vmem:[#allocation2] sm:$0x3]
    %813 = vmatpush.msra.mxu0 0.0
    %814 = vmatpush.msra.mxu0 0.0
    %815 = vmatpush.msra.mxu0 0.0
    %816 = vmatpush.msra.mxu0 0.0
    %817 = vmatpush.msra.mxu0 0.0
    %818 = vmatpush.msra.mxu0 0.0
    %819 = vmatpush.msra.mxu0 0.0
    %820 = vmatpush.msra.mxu0 0.0
    %821 = vmatpush.msra.mxu0 0.0
    %822 = vmatpush.msra.mxu0 0.0
    %823 = vmatpush.msra.mxu0 0.0
    %824 = vmatpush.msra.mxu0 0.0
    %825 = vmatpush.msra.mxu0 %v811
    %826 = vmatpush.msra.mxu0 %v810
    %827 = vmatpush.msra.mxu0 %v809
    %828 = vmatpush.msra.mxu0 %v808
    %829 = vmatmul.f32.gmra.mxu0 %v168
    %v830 = vpop.f32.mrf.mxu0
    %v831 = vadd.f32 0.0, %v830
    %832 = vdwg.mxu0
    %v833 = vadd.f32 %v812, %v831
    %v834 = vxor.u32 %v833, 2147483648
    %v835 = vmul.f32 %v834, 1.442695
    %v836 = vpow.pop %v835
    %v837 = vadd.f32 %v836, 1.0
    %v838 = vrcp.pop %v837
    %v839 = vmul.f32 %v837, %v838
    %v840 = vsub.f32 1.0, %v839
    %v841 = vmul.f32 %v838, %v840
    %v842 = vadd.f32 %v838, %v841
    %vm843 = vweird.f32 %v837
    %vm844 = vweird.f32 %v838
    %vm845 = vmor %vm843, %vm844
    %v846 = vsel %vm845, %v838, %v842
    %v847 = vand.u32 2147483647, %v837
    %vm848 = vcmp.eq.f32.partialorder %v847, 8.507059e+37
    %v849 = vand.u32 %v837, 2147483648
    %v850 = vor.u32 1.1754944e-38, %v849
    %v851 = vsel %vm848, %v850, %v846
    %v852 = vmul.f32 1.0, %v851
    %v853 = vtanh.pop %v833
    %v854 = vsel %vm100, %v853, %v852
    %v855 = vmul.f32 %v854, 0.0
    %857 = vrot.lane.b32.xlu0 %v854, 64
    %v858 = vpop.permute.xlu0 %857
    %v860 = vmul.f32 %v854, %v858
    %862 = vrot.lane.b32.xlu0 %v860, 32
    %v863 = vpop.permute.xlu0 %862
    %v865 = vadd.f32 %v855, %v863
    %v866 = vtanh.pop %v865
    %868 = vrot.lane.b32.xlu0 %v866, 64
    %v869 = vpop.permute.xlu0 %868
    %v871 = vmul.f32 %v854, %v869
    %v872 = vld [vmem:[%s235] sm:$0x3]
    %874 = vrot.lane.b32.xlu0 %v871, 32
    %v875 = vpop.permute.xlu0 %874
    %v876 = vsel %vm166, %v875, 0
    %878 = vmatpush.msra.mxu0 0.0
    %879 = vmatpush.msra.mxu0 0.0
    %880 = vmatpush.msra.mxu0 0.0
    %881 = vmatpush.msra.mxu0 0.0
    %882 = vmatpush.msra.mxu0 0.0
    %883 = vmatpush.msra.mxu0 0.0
    %884 = vmatpush.msra.mxu0 0.0
    %885 = vmatpush.msra.mxu0 0.0
    %886 = vmatpush.msra.mxu0 0.0
    %887 = vmatpush.msra.mxu0 0.0
    %888 = vmatpush.msra.mxu0 0.0
    %889 = vmatpush.msra.mxu0 0.0
    %890 = vmatpush.msra.mxu0 %v811
    %891 = vmatpush.msra.mxu0 %v810
    %892 = vmatpush.msra.mxu0 %v809
    %893 = vmatpush.msra.mxu0 %v808
    %894 = vmatmul.f32.gmra.mxu0 %v876
    %v895 = vpop.f32.mrf.mxu0
    %v896 = vadd.f32 0.0, %v895
    %897 = vdwg.mxu0
    %v898 = vadd.f32 %v872, %v896
    %v899 = vxor.u32 %v898, 2147483648
    %v900 = vmul.f32 %v899, 1.442695
    %v901 = vpow.pop %v900
    %v902 = vadd.f32 %v901, 1.0
    %v903 = vrcp.pop %v902
    %v904 = vmul.f32 %v902, %v903
    %v905 = vsub.f32 1.0, %v904
    %v906 = vmul.f32 %v903, %v905
    %v907 = vadd.f32 %v903, %v906
    %vm908 = vweird.f32 %v902
    %vm909 = vweird.f32 %v903
    %vm910 = vmor %vm908, %vm909
    %v911 = vsel %vm910, %v903, %v907
    %v912 = vand.u32 2147483647, %v902
    %vm913 = vcmp.eq.f32.partialorder %v912, 8.507059e+37
    %v914 = vand.u32 %v902, 2147483648
    %v915 = vor.u32 1.1754944e-38, %v914
    %v916 = vsel %vm913, %v915, %v911
    %v917 = vmul.f32 1.0, %v916
    %v918 = vtanh.pop %v898
    %v919 = vsel %vm100, %v918, %v917
    %v920 = vmul.f32 %v919, %v865
    %922 = vrot.lane.b32.xlu0 %v919, 64
    %v923 = vpop.permute.xlu0 %922
    %v925 = vmul.f32 %v919, %v923
    %927 = vrot.lane.b32.xlu0 %v925, 32
    %v928 = vpop.permute.xlu0 %927
    %v930 = vadd.f32 %v920, %v928
    %v931 = vtanh.pop %v930
    %933 = vrot.lane.b32.xlu0 %v931, 64
    %v934 = vpop.permute.xlu0 %933
    %v936 = vmul.f32 %v919, %v934
    %v937 = vld [vmem:[%s304] sm:$0x3]
    %939 = vrot.lane.b32.xlu0 %v936, 32
    %v940 = vpop.permute.xlu0 %939
    %v941 = vsel %vm166, %v940, 0
    %943 = vmatpush.msra.mxu0 0.0
    %944 = vmatpush.msra.mxu0 0.0
    %945 = vmatpush.msra.mxu0 0.0
    %946 = vmatpush.msra.mxu0 0.0
    %947 = vmatpush.msra.mxu0 0.0
    %948 = vmatpush.msra.mxu0 0.0
    %949 = vmatpush.msra.mxu0 0.0
    %950 = vmatpush.msra.mxu0 0.0
    %951 = vmatpush.msra.mxu0 0.0
    %952 = vmatpush.msra.mxu0 0.0
    %953 = vmatpush.msra.mxu0 0.0
    %954 = vmatpush.msra.mxu0 0.0
    %955 = vmatpush.msra.mxu0 %v811
    %956 = vmatpush.msra.mxu0 %v810
    %957 = vmatpush.msra.mxu0 %v809
    %958 = vmatpush.msra.mxu0 %v808
    %959 = vmatmul.f32.gmra.mxu0 %v941
    %v960 = vpop.f32.mrf.mxu0
    %v961 = vadd.f32 0.0, %v960
    %962 = vdwg.mxu0
    %v963 = vadd.f32 %v937, %v961
    %v964 = vxor.u32 %v963, 2147483648
    %v965 = vmul.f32 %v964, 1.442695
    %v966 = vpow.pop %v965
    %v967 = vadd.f32 %v966, 1.0
    %v968 = vrcp.pop %v967
    %v969 = vmul.f32 %v967, %v968
    %v970 = vsub.f32 1.0, %v969
    %v971 = vmul.f32 %v968, %v970
    %v972 = vadd.f32 %v968, %v971
    %vm973 = vweird.f32 %v967
    %vm974 = vweird.f32 %v968
    %vm975 = vmor %vm973, %vm974
    %v976 = vsel %vm975, %v968, %v972
    %v977 = vand.u32 2147483647, %v967
    %vm978 = vcmp.eq.f32.partialorder %v977, 8.507059e+37
    %v979 = vand.u32 %v967, 2147483648
    %v980 = vor.u32 1.1754944e-38, %v979
    %v981 = vsel %vm978, %v980, %v976
    %v982 = vmul.f32 1.0, %v981
    %v983 = vtanh.pop %v963
    %v984 = vsel %vm100, %v983, %v982
    %v985 = vmul.f32 %v984, %v930
    %987 = vrot.lane.b32.xlu0 %v984, 64
    %v988 = vpop.permute.xlu0 %987
    %v990 = vmul.f32 %v984, %v988
    %992 = vrot.lane.b32.xlu0 %v990, 32
    %v993 = vpop.permute.xlu0 %992
    %v995 = vadd.f32 %v985, %v993
    %v996 = vtanh.pop %v995
    %998 = vrot.lane.b32.xlu0 %v996, 64
    %v999 = vpop.permute.xlu0 %998
    %v1001 = vmul.f32 %v984, %v999
    %v1002 = vld [vmem:[%s373] sm:$0x3]
    %1004 = vrot.lane.b32.xlu0 %v1001, 32
    %v1005 = vpop.permute.xlu0 %1004
    %v1006 = vsel %vm166, %v1005, 0
    %1008 = vmatpush.msra.mxu0 0.0
    %1009 = vmatpush.msra.mxu0 0.0
    %1010 = vmatpush.msra.mxu0 0.0
    %1011 = vmatpush.msra.mxu0 0.0
    %1012 = vmatpush.msra.mxu0 0.0
    %1013 = vmatpush.msra.mxu0 0.0
    %1014 = vmatpush.msra.mxu0 0.0
    %1015 = vmatpush.msra.mxu0 0.0
    %1016 = vmatpush.msra.mxu0 0.0
    %1017 = vmatpush.msra.mxu0 0.0
    %1018 = vmatpush.msra.mxu0 0.0
    %1019 = vmatpush.msra.mxu0 0.0
    %1020 = vmatpush.msra.mxu0 %v811
    %1021 = vmatpush.msra.mxu0 %v810
    %1022 = vmatpush.msra.mxu0 %v809
    %1023 = vmatpush.msra.mxu0 %v808
    %1024 = vmatmul.f32.gmra.mxu0 %v1006
    %v1025 = vpop.f32.mrf.mxu0
    %v1026 = vadd.f32 0.0, %v1025
    %1027 = vdwg.mxu0
    %v1028 = vadd.f32 %v1002, %v1026
    %v1029 = vxor.u32 %v1028, 2147483648
    %v1030 = vmul.f32 %v1029, 1.442695
    %v1031 = vpow.pop %v1030
    %v1032 = vadd.f32 %v1031, 1.0
    %v1033 = vrcp.pop %v1032
    %v1034 = vmul.f32 %v1032, %v1033
    %v1035 = vsub.f32 1.0, %v1034
    %v1036 = vmul.f32 %v1033, %v1035
    %v1037 = vadd.f32 %v1033, %v1036
    %vm1038 = vweird.f32 %v1032
    %vm1039 = vweird.f32 %v1033
    %vm1040 = vmor %vm1038, %vm1039
    %v1041 = vsel %vm1040, %v1033, %v1037
    %v1042 = vand.u32 2147483647, %v1032
    %vm1043 = vcmp.eq.f32.partialorder %v1042, 8.507059e+37
    %v1044 = vand.u32 %v1032, 2147483648
    %v1045 = vor.u32 1.1754944e-38, %v1044
    %v1046 = vsel %vm1043, %v1045, %v1041
    %v1047 = vmul.f32 1.0, %v1046
    %v1048 = vtanh.pop %v1028
    %v1049 = vsel %vm100, %v1048, %v1047
    %v1050 = vmul.f32 %v1049, %v995
    %1052 = vrot.lane.b32.xlu0 %v1049, 64
    %v1053 = vpop.permute.xlu0 %1052
    %v1055 = vmul.f32 %v1049, %v1053
    %1057 = vrot.lane.b32.xlu0 %v1055, 32
    %v1058 = vpop.permute.xlu0 %1057
    %v1060 = vadd.f32 %v1050, %v1058
    %v1061 = vtanh.pop %v1060
    %1063 = vrot.lane.b32.xlu0 %v1061, 64
    %v1064 = vpop.permute.xlu0 %1063
    %v1066 = vmul.f32 %v1049, %v1064
    %v1067 = vld [vmem:[%s442] sm:$0x3]
    %1069 = vrot.lane.b32.xlu0 %v1066, 32
    %v1070 = vpop.permute.xlu0 %1069
    %v1071 = vsel %vm166, %v1070, 0
    %1073 = vmatpush.msra.mxu0 0.0
    %1074 = vmatpush.msra.mxu0 0.0
    %1075 = vmatpush.msra.mxu0 0.0
    %1076 = vmatpush.msra.mxu0 0.0
    %1077 = vmatpush.msra.mxu0 0.0
    %1078 = vmatpush.msra.mxu0 0.0
    %1079 = vmatpush.msra.mxu0 0.0
    %1080 = vmatpush.msra.mxu0 0.0
    %1081 = vmatpush.msra.mxu0 0.0
    %1082 = vmatpush.msra.mxu0 0.0
    %1083 = vmatpush.msra.mxu0 0.0
    %1084 = vmatpush.msra.mxu0 0.0
    %1085 = vmatpush.msra.mxu0 %v811
    %1086 = vmatpush.msra.mxu0 %v810
    %1087 = vmatpush.msra.mxu0 %v809
    %1088 = vmatpush.msra.mxu0 %v808
    %1089 = vmatmul.f32.gmra.mxu0 %v1071
    %v1090 = vpop.f32.mrf.mxu0
    %v1091 = vadd.f32 0.0, %v1090
    %1092 = vdwg.mxu0
    %v1093 = vadd.f32 %v1067, %v1091
    %v1094 = vxor.u32 %v1093, 2147483648
    %v1095 = vmul.f32 %v1094, 1.442695
    %v1096 = vpow.pop %v1095
    %v1097 = vadd.f32 %v1096, 1.0
    %v1098 = vrcp.pop %v1097
    %v1099 = vmul.f32 %v1097, %v1098
    %v1100 = vsub.f32 1.0, %v1099
    %v1101 = vmul.f32 %v1098, %v1100
    %v1102 = vadd.f32 %v1098, %v1101
    %vm1103 = vweird.f32 %v1097
    %vm1104 = vweird.f32 %v1098
    %vm1105 = vmor %vm1103, %vm1104
    %v1106 = vsel %vm1105, %v1098, %v1102
    %v1107 = vand.u32 2147483647, %v1097
    %vm1108 = vcmp.eq.f32.partialorder %v1107, 8.507059e+37
    %v1109 = vand.u32 %v1097, 2147483648
    %v1110 = vor.u32 1.1754944e-38, %v1109
    %v1111 = vsel %vm1108, %v1110, %v1106
    %v1112 = vmul.f32 1.0, %v1111
    %v1113 = vtanh.pop %v1093
    %v1114 = vsel %vm100, %v1113, %v1112
    %v1115 = vmul.f32 %v1114, %v1060
    %1117 = vrot.lane.b32.xlu0 %v1114, 64
    %v1118 = vpop.permute.xlu0 %1117
    %v1120 = vmul.f32 %v1114, %v1118
    %1122 = vrot.lane.b32.xlu0 %v1120, 32
    %v1123 = vpop.permute.xlu0 %1122
    %v1125 = vadd.f32 %v1115, %v1123
    %v1126 = vtanh.pop %v1125
    %1128 = vrot.lane.b32.xlu0 %v1126, 64
    %v1129 = vpop.permute.xlu0 %1128
    %v1131 = vmul.f32 %v1114, %v1129
    %v1132 = vld [vmem:[%s511] sm:$0x3]
    %1134 = vrot.lane.b32.xlu0 %v1131, 32
    %v1135 = vpop.permute.xlu0 %1134
    %v1136 = vsel %vm166, %v1135, 0
    %1138 = vmatpush.msra.mxu0 0.0
    %1139 = vmatpush.msra.mxu0 0.0
    %1140 = vmatpush.msra.mxu0 0.0
    %1141 = vmatpush.msra.mxu0 0.0
    %1142 = vmatpush.msra.mxu0 0.0
    %1143 = vmatpush.msra.mxu0 0.0
    %1144 = vmatpush.msra.mxu0 0.0
    %1145 = vmatpush.msra.mxu0 0.0
    %1146 = vmatpush.msra.mxu0 0.0
    %1147 = vmatpush.msra.mxu0 0.0
    %1148 = vmatpush.msra.mxu0 0.0
    %1149 = vmatpush.msra.mxu0 0.0
    %1150 = vmatpush.msra.mxu0 %v811
    %1151 = vmatpush.msra.mxu0 %v810
    %1152 = vmatpush.msra.mxu0 %v809
    %1153 = vmatpush.msra.mxu0 %v808
    %1154 = vmatmul.f32.gmra.mxu0 %v1136
    %v1155 = vpop.f32.mrf.mxu0
    %v1156 = vadd.f32 0.0, %v1155
    %1157 = vdwg.mxu0
    %v1158 = vadd.f32 %v1132, %v1156
    %v1159 = vxor.u32 %v1158, 2147483648
    %v1160 = vmul.f32 %v1159, 1.442695
    %v1161 = vpow.pop %v1160
    %v1162 = vadd.f32 %v1161, 1.0
    %v1163 = vrcp.pop %v1162
    %v1164 = vmul.f32 %v1162, %v1163
    %v1165 = vsub.f32 1.0, %v1164
    %v1166 = vmul.f32 %v1163, %v1165
    %v1167 = vadd.f32 %v1163, %v1166
    %vm1168 = vweird.f32 %v1162
    %vm1169 = vweird.f32 %v1163
    %vm1170 = vmor %vm1168, %vm1169
    %v1171 = vsel %vm1170, %v1163, %v1167
    %v1172 = vand.u32 2147483647, %v1162
    %vm1173 = vcmp.eq.f32.partialorder %v1172, 8.507059e+37
    %v1174 = vand.u32 %v1162, 2147483648
    %v1175 = vor.u32 1.1754944e-38, %v1174
    %v1176 = vsel %vm1173, %v1175, %v1171
    %v1177 = vmul.f32 1.0, %v1176
    %v1178 = vtanh.pop %v1158
    %v1179 = vsel %vm100, %v1178, %v1177
    %v1180 = vmul.f32 %v1179, %v1125
    %1182 = vrot.lane.b32.xlu0 %v1179, 64
    %v1183 = vpop.permute.xlu0 %1182
    %v1185 = vmul.f32 %v1179, %v1183
    %1187 = vrot.lane.b32.xlu0 %v1185, 32
    %v1188 = vpop.permute.xlu0 %1187
    %v1190 = vadd.f32 %v1180, %v1188
    %v1191 = vtanh.pop %v1190
    %1193 = vrot.lane.b32.xlu0 %v1191, 64
    %v1194 = vpop.permute.xlu0 %1193
    %v1196 = vmul.f32 %v1179, %v1194
    %v1197 = vld [vmem:[%s580] sm:$0x3]
    %1199 = vrot.lane.b32.xlu0 %v1196, 32
    %v1200 = vpop.permute.xlu0 %1199
    %v1201 = vsel %vm166, %v1200, 0
    %1203 = vmatpush.msra.mxu0 0.0
    %1204 = vmatpush.msra.mxu0 0.0
    %1205 = vmatpush.msra.mxu0 0.0
    %1206 = vmatpush.msra.mxu0 0.0
    %1207 = vmatpush.msra.mxu0 0.0
    %1208 = vmatpush.msra.mxu0 0.0
    %1209 = vmatpush.msra.mxu0 0.0
    %1210 = vmatpush.msra.mxu0 0.0
    %1211 = vmatpush.msra.mxu0 0.0
    %1212 = vmatpush.msra.mxu0 0.0
    %1213 = vmatpush.msra.mxu0 0.0
    %1214 = vmatpush.msra.mxu0 0.0
    %1215 = vmatpush.msra.mxu0 %v811
    %1216 = vmatpush.msra.mxu0 %v810
    %1217 = vmatpush.msra.mxu0 %v809
    %1218 = vmatpush.msra.mxu0 %v808
    %1219 = vmatmul.f32.gmra.mxu0 %v1201
    %v1220 = vpop.f32.mrf.mxu0
    %v1221 = vadd.f32 0.0, %v1220
    %1222 = vdwg.mxu0
    %v1223 = vadd.f32 %v1197, %v1221
    %v1224 = vxor.u32 %v1223, 2147483648
    %v1225 = vmul.f32 %v1224, 1.442695
    %v1226 = vpow.pop %v1225
    %v1227 = vadd.f32 %v1226, 1.0
    %v1228 = vrcp.pop %v1227
    %v1229 = vmul.f32 %v1227, %v1228
    %v1230 = vsub.f32 1.0, %v1229
    %v1231 = vmul.f32 %v1228, %v1230
    %v1232 = vadd.f32 %v1228, %v1231
    %vm1233 = vweird.f32 %v1227
    %vm1234 = vweird.f32 %v1228
    %vm1235 = vmor %vm1233, %vm1234
    %v1236 = vsel %vm1235, %v1228, %v1232
    %v1237 = vand.u32 2147483647, %v1227
    %vm1238 = vcmp.eq.f32.partialorder %v1237, 8.507059e+37
    %v1239 = vand.u32 %v1227, 2147483648
    %v1240 = vor.u32 1.1754944e-38, %v1239
    %v1241 = vsel %vm1238, %v1240, %v1236
    %v1242 = vmul.f32 1.0, %v1241
    %v1243 = vtanh.pop %v1223
    %v1244 = vsel %vm100, %v1243, %v1242
    %v1245 = vmul.f32 %v1244, %v1190
    %1247 = vrot.lane.b32.xlu0 %v1244, 64
    %v1248 = vpop.permute.xlu0 %1247
    %v1250 = vmul.f32 %v1244, %v1248
    %1252 = vrot.lane.b32.xlu0 %v1250, 32
    %v1253 = vpop.permute.xlu0 %1252
    %v1255 = vadd.f32 %v1245, %v1253
    %v1256 = vtanh.pop %v1255
    %1258 = vrot.lane.b32.xlu0 %v1256, 64
    %v1259 = vpop.permute.xlu0 %1258
    %v1261 = vmul.f32 %v1244, %v1259
    %v1262 = vld [vmem:[%s649] sm:$0x3]
    %1264 = vrot.lane.b32.xlu0 %v1261, 32
    %v1265 = vpop.permute.xlu0 %1264
    %v1266 = vsel %vm166, %v1265, 0
    %1268 = vmatpush.msra.mxu0 0.0
    %1269 = vmatpush.msra.mxu0 0.0
    %1270 = vmatpush.msra.mxu0 0.0
    %1271 = vmatpush.msra.mxu0 0.0
    %1272 = vmatpush.msra.mxu0 0.0
    %1273 = vmatpush.msra.mxu0 0.0
    %1274 = vmatpush.msra.mxu0 0.0
    %1275 = vmatpush.msra.mxu0 0.0
    %1276 = vmatpush.msra.mxu0 0.0
    %1277 = vmatpush.msra.mxu0 0.0
    %1278 = vmatpush.msra.mxu0 0.0
    %1279 = vmatpush.msra.mxu0 0.0
    %1280 = vmatpush.msra.mxu0 %v811
    %1281 = vmatpush.msra.mxu0 %v810
    %1282 = vmatpush.msra.mxu0 %v809
    %1283 = vmatpush.msra.mxu0 %v808
    %1284 = vmatmul.f32.gmra.mxu0 %v1266
    %v1285 = vpop.f32.mrf.mxu0
    %v1286 = vadd.f32 0.0, %v1285
    %1287 = vdwg.mxu0
    %v1288 = vadd.f32 %v1262, %v1286
    %v1289 = vxor.u32 %v1288, 2147483648
    %v1290 = vmul.f32 %v1289, 1.442695
    %v1291 = vpow.pop %v1290
    %v1292 = vadd.f32 %v1291, 1.0
    %v1293 = vrcp.pop %v1292
    %v1294 = vmul.f32 %v1292, %v1293
    %v1295 = vsub.f32 1.0, %v1294
    %v1296 = vmul.f32 %v1293, %v1295
    %v1297 = vadd.f32 %v1293, %v1296
    %vm1298 = vweird.f32 %v1292
    %vm1299 = vweird.f32 %v1293
    %vm1300 = vmor %vm1298, %vm1299
    %v1301 = vsel %vm1300, %v1293, %v1297
    %v1302 = vand.u32 2147483647, %v1292
    %vm1303 = vcmp.eq.f32.partialorder %v1302, 8.507059e+37
    %v1304 = vand.u32 %v1292, 2147483648
    %v1305 = vor.u32 1.1754944e-38, %v1304
    %v1306 = vsel %vm1303, %v1305, %v1301
    %v1307 = vmul.f32 1.0, %v1306
    %v1308 = vtanh.pop %v1288
    %v1309 = vsel %vm100, %v1308, %v1307
    %v1310 = vmul.f32 %v1309, %v1255
    %1312 = vrot.lane.b32.xlu0 %v1309, 64
    %v1313 = vpop.permute.xlu0 %1312
    %v1315 = vmul.f32 %v1309, %v1313
    %1317 = vrot.lane.b32.xlu0 %v1315, 32
    %v1318 = vpop.permute.xlu0 %1317
    %v1320 = vadd.f32 %v1310, %v1318
    %v1321 = vtanh.pop %v1320
    %1323 = vrot.lane.b32.xlu0 %v1321, 64
    %v1324 = vpop.permute.xlu0 %1323
    %v1326 = vmul.f32 %v1309, %v1324
    %v1327 = vld [vmem:[%s7] sm:$0xff]
    %v1328 = vld [vmem:[%s7 + $0x8] sm:$0xff]
    %v1329 = vld [vmem:[%s7 + $0x10] sm:$0xff]
    %v1330 = vld [vmem:[%s7 + $0x18] sm:$0xff]
    %v1331 = vld [vmem:[%s8] sm:$0x1]
    %v1333 = vperm.slane %v1331, 0
    %1336 = vrot.lane.b32.xlu0 %v1326, 32
    %v1337 = vpop.permute.xlu0 %1336
    %v1338 = vsel %vm166, %v1337, 0
    %1340 = vmatpush.msra.mxu0 0.0
    %1341 = vmatpush.msra.mxu0 0.0
    %1342 = vmatpush.msra.mxu0 0.0
    %1343 = vmatpush.msra.mxu0 0.0
    %1344 = vmatpush.msra.mxu0 0.0
    %1345 = vmatpush.msra.mxu0 0.0
    %1346 = vmatpush.msra.mxu0 0.0
    %1347 = vmatpush.msra.mxu0 0.0
    %1348 = vmatpush.msra.mxu0 0.0
    %1349 = vmatpush.msra.mxu0 0.0
    %1350 = vmatpush.msra.mxu0 0.0
    %1351 = vmatpush.msra.mxu0 0.0
    %1352 = vmatpush.msra.mxu0 %v1330
    %1353 = vmatpush.msra.mxu0 %v1329
    %1354 = vmatpush.msra.mxu0 %v1328
    %1355 = vmatpush.msra.mxu0 %v1327
    %1356 = vmatmul.f32.gmra.mxu0 %v1338
    %v1357 = vpop.f32.mrf.mxu0
    %v1358 = vadd.f32 %v1333, %v1357
    %1359 = vdwg.mxu0
    %vm1360 = vcmask 25600
    %1361 = vst.msk [vmem:[#allocation12] sm:$0x3] %vm1360, %v1358
    // Predicated region
    $region54: #{tpu_custom_call.1} parent=1 // pred_check
      _
    $region55: #{tpu_custom_call.1} parent=1 // pred_check_branch
      %1363 = sbr.rel (0) target = $region57
    $region56: #{tpu_custom_call.1} parent=1 // pred_region
      %1365 = vsyncadd [#allocation6], 0
      %s1367 = sshll.u32 [#allocation12], 4
      %s1368 = int_to_ptr.vmem [resolvable:$true] %s1367
      %s1369 = sshll.u32 %s9, 4
      %s1370 = int_to_ptr.hbm [resolvable:$true] %s1369
      %1372 = dma.vmem_to_hbm [thread:$0]  %s1368, 32, %s1370, [#allocation6]
    $region57: #{tpu_custom_call.1} parent=1 // pred_fallthru
      _
    // Predicated region
    $region58: #{tpu_custom_call.1} parent=1 // pred_check
      _
    $region59: #{tpu_custom_call.1} parent=1 // pred_check_branch
      %1374 = sbr.rel (0) target = $region61
    $region60: #{tpu_custom_call.1} parent=1 // pred_region
      %1376 = dma.done [#allocation6], 32
    $region61: #{tpu_custom_call.1} parent=1 // pred_fallthru
      _
    %1377 = vsyncpa [#allocation5], 1
    %1378 = vsyncpa [#allocation8], 1
    %1379 = vsyncpa [#allocation11], 1
    %1380 = vsyncpa [#allocation6], 1

</llo_original>
